<compile_context>
chip_gen: v6e
topology: v6e:2x2x1
jax: 0.10.0
libtpu: 0.0.40
codegen_flags: <defaults>
</compile_context>

<pallas_src>
import functools

import jax
import jax.numpy as jnp
from jax.experimental import pallas as pl
from jax.experimental.pallas import tpu as pltpu

EPS = 1e-5  # torch.nn.BatchNorm2d default


def _round_up(n, m):
    return (n + m - 1) // m * m


def _fold_bn(w, gamma, beta, mean, var):
    """Fold inference BatchNorm into a conv whose out-channel axis is last."""
    scale = gamma / jnp.sqrt(var + EPS)          # (out,)
    return w * scale, beta - mean * scale


def inverted_residual_kernel(x_ref, xh_ref, w1_ref, b1_ref, wdw_ref, b2_ref,
                             w2_ref, b3_ref, o_ref, pad_ref, *, TR, W, use_res):
    """One (batch, row-tile) block per grid step.

    x_ref   : (1, TR, W, Cp)    bf16 tile of input tokens (channels padded to Cp)
    xh_ref  : (1, 1, 2, W, Cp)  bf16 halo rows: [row above tile, row below tile]
    w1_ref  : (Cp, Ep)          bf16 folded 1x1 expand weights (BN1 scale folded)
    b1_ref  : (1, Ep)           f32 folded BN1 shift
    wdw_ref : (9, Ep)           f32 folded depthwise 3x3 taps (BN2 scale folded)
    b2_ref  : (1, Ep)           f32 folded BN2 shift
    w2_ref  : (Ep, Cp)          bf16 folded 1x1 project weights (BN3 scale folded)
    b3_ref  : (1, Cp)           f32 folded BN3 shift
    o_ref   : (1, TR, W, Cp)    f32 output tile
    pad_ref : (TR+2, W+16, Ep)  f32 scratch for the 3x3 depthwise halo. Interior
              written at sublane offset 8 (aligned store); taps read at
              offsets 7/8/9 (cheap unaligned loads). All rows (incl. halo rows)
              are overwritten every step, so only the left/right column strips
              are zeroed per step.
    """
    Ep = w1_ref.shape[1]
    Cp = w1_ref.shape[0]
    r = pl.program_id(1)
    last_r = pl.num_programs(1) - 1

    x = x_ref[...].reshape(TR * W, Cp)                     # bf16
    xh = xh_ref[...].reshape(2 * W, Cp)                    # bf16

    # ---- 1x1 expand conv (+ folded BN1): bf16 operands, f32 accumulate ----
    h = jnp.dot(x, w1_ref[...], preferred_element_type=jnp.float32) + b1_ref[...]
    hh = jnp.dot(xh, w1_ref[...], preferred_element_type=jnp.float32) + b1_ref[...]
    hh = hh.reshape(2, W, Ep)

    # Halo rows at the image boundary must be true zeros (the depthwise conv
    # zero-pads the post-BN1 feature map), so mask them by row-tile position.
    top_valid = (r > 0).astype(jnp.float32)
    bot_valid = (r < last_r).astype(jnp.float32)

    # Zero only the 8-wide left/right column strips (the taps read columns 7
    # and W+8 from them); every row of the interior strip is written below.
    zcols = jnp.zeros((TR + 2, 8, Ep), jnp.float32)
    pad_ref[:, 0:8, :] = zcols
    pad_ref[:, W + 8:W + 16, :] = zcols

    pad_ref[0:1, 8:8 + W, :] = hh[0:1] * top_valid
    pad_ref[1:TR + 1, 8:8 + W, :] = h.reshape(TR, W, Ep)
    pad_ref[TR + 1:TR + 2, 8:8 + W, :] = hh[1:2] * bot_valid

    # ---- depthwise 3x3, stride 1, pad 1 (+ folded BN2), then SiLU (f32) ----
    wdw = wdw_ref[...]                                     # (9, Ep) f32, resident
    acc = None
    for k in range(9):                                     # statically unrolled taps
        dy, dx = divmod(k, 3)
        tap = pad_ref[dy:dy + TR, 7 + dx:7 + dx + W, :] * wdw[k].reshape(1, 1, Ep)
        acc = tap if acc is None else acc + tap
    acc = acc + b2_ref[...].reshape(1, 1, Ep)
    act = acc * jax.nn.sigmoid(acc)                        # SiLU (EUP sigmoid)

    # ---- 1x1 project conv (+ folded BN3): bf16 operands, f32 accumulate ----
    a2 = act.reshape(TR * W, Ep).astype(w2_ref.dtype)
    y = jnp.dot(a2, w2_ref[...], preferred_element_type=jnp.float32) + b3_ref[...]

    if use_res:
        y = y + x.astype(jnp.float32)

    o_ref[...] = y.reshape(1, TR, W, Cp).astype(o_ref.dtype)


@functools.partial(jax.jit, static_argnames=("stride",))
def inverted_residual_pallas(x_nchw, params, *, stride=1):
    """x_nchw: (B, C, H, W). params: conv weights + BatchNorm stats (see __main__)."""
    if stride != 1:
        # TODO(synk): stride=2 downsampling depthwise path not implemented.
        raise NotImplementedError("only stride=1 is implemented")

    w1, (g1, be1, m1, v1) = params["w1"], params["bn1"]
    wdw, (g2, be2, m2, v2) = params["wdw"], params["bn2"]
    w2, (g3, be3, m3, v3) = params["w2"], params["bn3"]

    B, C, H, W = x_nchw.shape
    E = w1.shape[1]                                   # hidden (expanded) dim
    Cout = w2.shape[1]
    use_res = (stride == 1) and (C == Cout)
    out_dt = x_nchw.dtype
    mxu_dt = jnp.bfloat16                             # MXU operand dtype (f32 accumulate)

    # Fold inference BatchNorm into the convs (scale into weights, shift as bias).
    w1f, b1f = _fold_bn(w1.astype(jnp.float32), g1, be1, m1, v1)      # (C,E),(E,)
    wdwf, b2f = _fold_bn(wdw.astype(jnp.float32), g2, be2, m2, v2)    # (3,3,E),(E,)
    w2f, b3f = _fold_bn(w2.astype(jnp.float32), g3, be3, m3, v3)      # (E,Cout),(Cout,)

    # Lane-dense padding: channel dims -> multiple of 128 (unmasked stores, full
    # MXU rows). NOTE: at real MobileViT widths on v6e/v7x, rounding to 256 fills
    # the 256-wide MXU better; at tiny demo widths the MXU path is mostly zeros.
    Cp = _round_up(max(C, Cout), 128)
    Ep = _round_up(E, 128)

    # Row tile: bounds per-step activation footprint (fits v7x 64 MiB VMEM at
    # real feature-map sizes) and gives megacore a second axis to split.
    TR = 8 if H % 8 == 0 else H
    R = H // TR

    # NHWC, cast to bf16 BEFORE lane-padding so the materialized tensor is half size.
    x = jnp.transpose(x_nchw, (0, 2, 3, 1)).astype(mxu_dt)
    x = jnp.pad(x, ((0, 0), (0, 0), (0, 0), (0, Cp - C)))             # (B,H,W,Cp)

    # Halo side input: x row above / below each row tile (zeros at image edges;
    # the kernel masks boundary halos anyway).
    top = jnp.pad(x, ((0, 0), (1, 0), (0, 0), (0, 0)))[:, 0:H:TR]     # (B,R,W,Cp)
    bot = jnp.pad(x, ((0, 0), (0, 1), (0, 0), (0, 0)))[:, TR::TR]     # (B,R,W,Cp)
    x_halo = jnp.stack([top, bot], axis=2)                            # (B,R,2,W,Cp)

    w1p = jnp.pad(w1f, ((0, Cp - C), (0, Ep - E))).astype(mxu_dt)
    b1p = jnp.pad(b1f, (0, Ep - E)).reshape(1, Ep).astype(jnp.float32)
    wdwp = jnp.pad(wdwf.reshape(9, E), ((0, 0), (0, Ep - E))).astype(jnp.float32)
    b2p = jnp.pad(b2f, (0, Ep - E)).reshape(1, Ep).astype(jnp.float32)
    w2p = jnp.pad(w2f, ((0, Ep - E), (0, Cp - Cout))).astype(mxu_dt)
    b3p = jnp.pad(b3f, (0, Cp - Cout)).reshape(1, Cp).astype(jnp.float32)

    kernel = functools.partial(inverted_residual_kernel, TR=TR, W=W, use_res=use_res)

    # --- VMEM budget (double-buffered blocks + weights + scratch + f32 temps) ---
    blk_in = TR * W * Cp * 2 + 2 * W * Cp * 2                         # x + halo (bf16)
    blk_out = TR * W * Cp * 4                                         # out (f32)
    wt = (Cp * Ep + Ep * Cp) * 2 + (9 * Ep + 2 * Ep + Cp) * 4
    scratch_b = (TR + 2) * (W + 16) * Ep * 4
    inter = 6 * (TR + 2) * W * Ep * 4                                 # h/acc/act temps
    vmem_limit = min(2 * (2 * (blk_in + blk_out + wt) + scratch_b + inter)
                     + (8 << 20), 120 * 1024 * 1024)

    # --- advisory cost estimate (all operands at true widths) ---
    flops = B * R * (2 * (TR + 2) * W * Cp * Ep          # expand conv (incl. halo)
                     + 2 * TR * W * Ep * Cp              # project conv
                     + 22 * TR * W * Ep)                 # depthwise + SiLU
    bytes_accessed = (x.size * 2 + x_halo.size * 2
                      + (w1p.size + w2p.size) * 2
                      + (wdwp.size + b1p.size + b2p.size + b3p.size) * 4
                      + B * H * W * Cp * 4)

    out = pl.pallas_call(
        kernel,
        out_shape=jax.ShapeDtypeStruct((B, H, W, Cp), out_dt),
        grid_spec=pltpu.PrefetchScalarGridSpec(
            num_scalar_prefetch=0,
            grid=(B, R),
            in_specs=[
                pl.BlockSpec((1, TR, W, Cp), lambda b, r: (b, r, 0, 0)),     # x tile
                pl.BlockSpec((1, 1, 2, W, Cp), lambda b, r: (b, r, 0, 0, 0)),  # halo rows
                pl.BlockSpec((Cp, Ep), lambda b, r: (0, 0)),                 # W1 (resident)
                pl.BlockSpec((1, Ep), lambda b, r: (0, 0)),                  # b1
                pl.BlockSpec((9, Ep), lambda b, r: (0, 0)),                  # depthwise taps
                pl.BlockSpec((1, Ep), lambda b, r: (0, 0)),                  # b2
                pl.BlockSpec((Ep, Cp), lambda b, r: (0, 0)),                 # W2 (resident)
                pl.BlockSpec((1, Cp), lambda b, r: (0, 0)),                  # b3
            ],
            out_specs=pl.BlockSpec((1, TR, W, Cp), lambda b, r: (b, r, 0, 0)),
            scratch_shapes=[pltpu.VMEM((TR + 2, W + 16, Ep), jnp.float32)],
        ),
        compiler_params=pltpu.CompilerParams(
            dimension_semantics=("parallel", "parallel"),
            vmem_limit_bytes=int(vmem_limit)),
        cost_estimate=pl.CostEstimate(
            flops=flops,
            transcendentals=B * H * W * Ep,
            bytes_accessed=int(bytes_accessed)),
    )(x, x_halo, w1p, b1p, wdwp, b2p, w2p, b3p)

    out = out[..., :Cout]
    return jnp.transpose(out, (0, 3, 1, 2)).astype(out_dt)


def inverted_residual_reference(x_nchw, params, *, stride=1):
    """Independent JAX reference (unfolded eval-mode BatchNorm, lax conv, f32)."""
    w1, (g1, be1, m1, v1) = params["w1"], params["bn1"]
    wdw, (g2, be2, m2, v2) = params["wdw"], params["bn2"]
    w2, (g3, be3, m3, v3) = params["w2"], params["bn3"]
    hi = jax.lax.Precision.HIGHEST

    def bn(y, g, b, m, v):
        return (y - m) * (g / jnp.sqrt(v + EPS)) + b

    x = jnp.transpose(x_nchw, (0, 2, 3, 1)).astype(jnp.float32)        # NHWC
    h = bn(jnp.einsum("bhwc,ce->bhwe", x, w1, precision=hi), g1, be1, m1, v1)
    E = w1.shape[1]
    d = jax.lax.conv_general_dilated(
        h, wdw.reshape(3, 3, 1, E),
        window_strides=(stride, stride), padding=((1, 1), (1, 1)),
        dimension_numbers=("NHWC", "HWIO", "NHWC"),
        feature_group_count=E, precision=hi)
    d = bn(d, g2, be2, m2, v2)
    d = d * jax.nn.sigmoid(d)                                          # SiLU
    y = bn(jnp.einsum("bhwe,ec->bhwc", d, w2, precision=hi), g3, be3, m3, v3)
    if stride == 1 and w1.shape[0] == w2.shape[1]:
        y = y + x
    return jnp.transpose(y, (0, 3, 1, 2)).astype(x_nchw.dtype)


if __name__ == "__main__":
    key = jax.random.PRNGKey(0)
    B, C, H, W = 2, 4, 16, 16
    expand_ratio = 2
    E = int(round(C * expand_ratio))
    keys = jax.random.split(key, 8)

    x = jax.random.normal(keys[0], (B, C, H, W), dtype=jnp.float32)

    # Conv weights in "channels-last math" layout (out-channel axis last);
    # equivalent to PyTorch's (out,in,kh,kw) weights transposed, no bias.
    lim1 = 1.0 / (C ** 0.5)
    w1 = jax.random.uniform(keys[1], (C, E), minval=-lim1, maxval=lim1,
                            dtype=jnp.float32)
    limd = 1.0 / (9 ** 0.5)
    wdw = jax.random.uniform(keys[2], (3, 3, E), minval=-limd, maxval=limd,
                             dtype=jnp.float32)
    lim2 = 1.0 / (E ** 0.5)
    w2 = jax.random.uniform(keys[3], (E, C), minval=-lim2, maxval=lim2,
                            dtype=jnp.float32)

    def bn_params(k, n):
        k1, k2, k3, k4 = jax.random.split(k, 4)
        gamma = jax.random.uniform(k1, (n,), minval=0.5, maxval=1.5, dtype=jnp.float32)
        beta = 0.1 * jax.random.normal(k2, (n,), dtype=jnp.float32)
        mean = 0.1 * jax.random.normal(k3, (n,), dtype=jnp.float32)
        var = jax.random.uniform(k4, (n,), minval=0.5, maxval=1.5, dtype=jnp.float32)
        return gamma, beta, mean, var

    params = {
        "w1": w1, "bn1": bn_params(keys[4], E),
        "wdw": wdw, "bn2": bn_params(keys[5], E),
        "w2": w2, "bn3": bn_params(keys[6], C),
    }

    out = inverted_residual_pallas(x, params)
    out = jax.block_until_ready(out)

    ref = inverted_residual_reference(x, params)
    assert out.shape == (B, C, H, W)
    # bf16 MXU operands (f32 accumulation) -> bf16-appropriate tolerance.
    assert jnp.allclose(out, ref, atol=5e-2, rtol=5e-2), (
        "mismatch vs reference, max abs err = "
        f"{jnp.max(jnp.abs(out - ref))}")

    print("KERNEL_OK")
</pallas_src>

<mosaic_0001>
module attributes {stable_mosaic.version = 11 : i64} {
  func.func @inverted_residual_kernel(%arg0: i32, %arg1: i32, %arg2: memref<1x8x16x128xbf16, #tpu.memory_space<vmem>>, %arg3: memref<1x1x2x16x128xbf16, #tpu.memory_space<vmem>>, %arg4: memref<128x128xbf16, #tpu.memory_space<vmem>>, %arg5: memref<1x128xf32, #tpu.memory_space<vmem>>, %arg6: memref<9x128xf32, #tpu.memory_space<vmem>>, %arg7: memref<1x128xf32, #tpu.memory_space<vmem>>, %arg8: memref<128x128xbf16, #tpu.memory_space<vmem>>, %arg9: memref<1x128xf32, #tpu.memory_space<vmem>>, %arg10: memref<1x8x16x128xf32, #tpu.memory_space<vmem>>, %arg11: memref<10x32x128xf32, #tpu.memory_space<vmem>>) attributes {dimension_semantics = [#tpu.dimension_semantics<parallel>, #tpu.dimension_semantics<parallel>], iteration_bounds = array<i64: 2, 2>, scalar_prefetch = 0 : i64, scratch_operands = 1 : i64, tpu.core_type = #tpu.core_type<tc>, window_params = [{transform_indices = @transform_0, window_bounds = array<i64: 1, 8, 16, 128>}, {transform_indices = @transform_1, window_bounds = array<i64: 1, 1, 2, 16, 128>}, {pipeline_mode = #tpu.pipeline_mode<synchronous>, transform_indices = @transform_2, window_bounds = array<i64: 128, 128>}, {pipeline_mode = #tpu.pipeline_mode<synchronous>, transform_indices = @transform_3, window_bounds = array<i64: 1, 128>}, {pipeline_mode = #tpu.pipeline_mode<synchronous>, transform_indices = @transform_4, window_bounds = array<i64: 9, 128>}, {pipeline_mode = #tpu.pipeline_mode<synchronous>, transform_indices = @transform_5, window_bounds = array<i64: 1, 128>}, {pipeline_mode = #tpu.pipeline_mode<synchronous>, transform_indices = @transform_6, window_bounds = array<i64: 128, 128>}, {pipeline_mode = #tpu.pipeline_mode<synchronous>, transform_indices = @transform_7, window_bounds = array<i64: 1, 128>}, {transform_indices = @transform_8, window_bounds = array<i64: 1, 8, 16, 128>}]} {
    %c0 = arith.constant 0 : index
    %c0_0 = arith.constant 0 : index
    %c0_1 = arith.constant 0 : index
    %c0_2 = arith.constant 0 : index
    %0 = vector.load %arg2[%c0, %c0_0, %c0_1, %c0_2] : memref<1x8x16x128xbf16, #tpu.memory_space<vmem>>, vector<1x8x16x128xbf16>
    %1 = vector.shape_cast %0 : vector<1x8x16x128xbf16> to vector<128x128xbf16>
    %c0_3 = arith.constant 0 : index
    %c0_4 = arith.constant 0 : index
    %c0_5 = arith.constant 0 : index
    %c0_6 = arith.constant 0 : index
    %c0_7 = arith.constant 0 : index
    %2 = vector.load %arg3[%c0_3, %c0_4, %c0_5, %c0_6, %c0_7] : memref<1x1x2x16x128xbf16, #tpu.memory_space<vmem>>, vector<1x1x2x16x128xbf16>
    %3 = vector.shape_cast %2 : vector<1x1x2x16x128xbf16> to vector<32x128xbf16>
    %c0_8 = arith.constant 0 : index
    %c0_9 = arith.constant 0 : index
    %4 = vector.load %arg4[%c0_8, %c0_9] : memref<128x128xbf16, #tpu.memory_space<vmem>>, vector<128x128xbf16>
    %cst = arith.constant dense<0.000000e+00> : vector<128x128xf32>
    %5 = tpu.matmul %1, %4, %cst {dimension_numbers = #tpu.dot_dimension_numbers<[1], [0], [0], [1], [0, 0, 1, 1], [], []>} : vector<128x128xbf16>, vector<128x128xbf16>, vector<128x128xf32> -> vector<128x128xf32>
    %c0_10 = arith.constant 0 : index
    %c0_11 = arith.constant 0 : index
    %6 = vector.load %arg5[%c0_10, %c0_11] : memref<1x128xf32, #tpu.memory_space<vmem>>, vector<1x128xf32>
    %7 = vector.broadcast %6 : vector<1x128xf32> to vector<128x128xf32>
    %8 = arith.addf %5, %7 : vector<128x128xf32>
    %c0_12 = arith.constant 0 : index
    %c0_13 = arith.constant 0 : index
    %9 = vector.load %arg4[%c0_12, %c0_13] : memref<128x128xbf16, #tpu.memory_space<vmem>>, vector<128x128xbf16>
    %cst_14 = arith.constant dense<0.000000e+00> : vector<32x128xf32>
    %10 = tpu.matmul %3, %9, %cst_14 {dimension_numbers = #tpu.dot_dimension_numbers<[1], [0], [0], [1], [0, 0, 1, 1], [], []>} : vector<32x128xbf16>, vector<128x128xbf16>, vector<32x128xf32> -> vector<32x128xf32>
    %c0_15 = arith.constant 0 : index
    %c0_16 = arith.constant 0 : index
    %11 = vector.load %arg5[%c0_15, %c0_16] : memref<1x128xf32, #tpu.memory_space<vmem>>, vector<1x128xf32>
    %12 = vector.broadcast %11 : vector<1x128xf32> to vector<32x128xf32>
    %13 = arith.addf %10, %12 : vector<32x128xf32>
    %14 = vector.shape_cast %13 : vector<32x128xf32> to vector<2x16x128xf32>
    %c0_i32 = arith.constant 0 : i32
    %15 = arith.cmpi sgt, %arg1, %c0_i32 : i32
    %16 = arith.extui %15 : i1 to i32
    %17 = arith.sitofp %16 : i32 to f32
    %c1_i32 = arith.constant 1 : i32
    %18 = arith.cmpi slt, %arg1, %c1_i32 : i32
    %19 = arith.extui %18 : i1 to i32
    %20 = arith.sitofp %19 : i32 to f32
    %cst_17 = arith.constant 0.000000e+00 : f32
    %21 = vector.broadcast %cst_17 : f32 to vector<10x8x128xf32>
    %c0_18 = arith.constant 0 : index
    %c0_19 = arith.constant 0 : index
    %c0_20 = arith.constant 0 : index
    %22 = vector.load %arg11[%c0_18, %c0_19, %c0_20] : memref<10x32x128xf32, #tpu.memory_space<vmem>>, vector<10x8x128xf32>
    tpu.vector_store %arg11[%c0_18, %c0_19, %c0_20], %21 {strides = array<i32>} : memref<10x32x128xf32, #tpu.memory_space<vmem>>, vector<10x8x128xf32>,
    %c0_21 = arith.constant 0 : index
    %c24 = arith.constant 24 : index
    %c0_22 = arith.constant 0 : index
    %23 = vector.load %arg11[%c0_21, %c24, %c0_22] : memref<10x32x128xf32, #tpu.memory_space<vmem>>, vector<10x8x128xf32>
    tpu.vector_store %arg11[%c0_21, %c24, %c0_22], %21 {strides = array<i32>} : memref<10x32x128xf32, #tpu.memory_space<vmem>>, vector<10x8x128xf32>,
    %24 = vector.extract_strided_slice %14 {offsets = [0, 0, 0], sizes = [1, 16, 128], strides = [1, 1, 1]} : vector<2x16x128xf32> to vector<1x16x128xf32>
    %25 = vector.broadcast %17 : f32 to vector<1x16x128xf32>
    %26 = arith.mulf %24, %25 : vector<1x16x128xf32>
    %c0_23 = arith.constant 0 : index
    %c8 = arith.constant 8 : index
    %c0_24 = arith.constant 0 : index
    %27 = vector.load %arg11[%c0_23, %c8, %c0_24] : memref<10x32x128xf32, #tpu.memory_space<vmem>>, vector<1x16x128xf32>
    tpu.vector_store %arg11[%c0_23, %c8, %c0_24], %26 {strides = array<i32>} : memref<10x32x128xf32, #tpu.memory_space<vmem>>, vector<1x16x128xf32>,
    %28 = vector.shape_cast %8 : vector<128x128xf32> to vector<8x16x128xf32>
    %c1 = arith.constant 1 : index
    %c8_25 = arith.constant 8 : index
    %c0_26 = arith.constant 0 : index
    %29 = vector.load %arg11[%c1, %c8_25, %c0_26] : memref<10x32x128xf32, #tpu.memory_space<vmem>>, vector<8x16x128xf32>
    tpu.vector_store %arg11[%c1, %c8_25, %c0_26], %28 {strides = array<i32>} : memref<10x32x128xf32, #tpu.memory_space<vmem>>, vector<8x16x128xf32>,
    %30 = vector.extract_strided_slice %14 {offsets = [1, 0, 0], sizes = [1, 16, 128], strides = [1, 1, 1]} : vector<2x16x128xf32> to vector<1x16x128xf32>
    %31 = vector.broadcast %20 : f32 to vector<1x16x128xf32>
    %32 = arith.mulf %30, %31 : vector<1x16x128xf32>
    %c9 = arith.constant 9 : index
    %c8_27 = arith.constant 8 : index
    %c0_28 = arith.constant 0 : index
    %33 = vector.load %arg11[%c9, %c8_27, %c0_28] : memref<10x32x128xf32, #tpu.memory_space<vmem>>, vector<1x16x128xf32>
    tpu.vector_store %arg11[%c9, %c8_27, %c0_28], %32 {strides = array<i32>} : memref<10x32x128xf32, #tpu.memory_space<vmem>>, vector<1x16x128xf32>,
    %c0_29 = arith.constant 0 : index
    %c0_30 = arith.constant 0 : index
    %34 = vector.load %arg6[%c0_29, %c0_30] : memref<9x128xf32, #tpu.memory_space<vmem>>, vector<9x128xf32>
    %c0_31 = arith.constant 0 : index
    %c7 = arith.constant 7 : index
    %c0_32 = arith.constant 0 : index
    %35 = vector.load %arg11[%c0_31, %c7, %c0_32] : memref<10x32x128xf32, #tpu.memory_space<vmem>>, vector<8x16x128xf32>
    %36 = vector.extract_strided_slice %34 {offsets = [0, 0], sizes = [1, 128], strides = [1, 1]} : vector<9x128xf32> to vector<1x128xf32>
    %37 = vector.shape_cast %36 : vector<1x128xf32> to vector<128xf32>
    %38 = vector.shape_cast %37 : vector<128xf32> to vector<1x1x128xf32>
    %39 = vector.broadcast %38 : vector<1x1x128xf32> to vector<8x16x128xf32>
    %40 = arith.mulf %35, %39 : vector<8x16x128xf32>
    %c0_33 = arith.constant 0 : index
    %c8_34 = arith.constant 8 : index
    %c0_35 = arith.constant 0 : index
    %41 = vector.load %arg11[%c0_33, %c8_34, %c0_35] : memref<10x32x128xf32, #tpu.memory_space<vmem>>, vector<8x16x128xf32>
    %42 = vector.extract_strided_slice %34 {offsets = [1, 0], sizes = [1, 128], strides = [1, 1]} : vector<9x128xf32> to vector<1x128xf32>
    %43 = vector.shape_cast %42 : vector<1x128xf32> to vector<128xf32>
    %44 = vector.shape_cast %43 : vector<128xf32> to vector<1x1x128xf32>
    %45 = vector.broadcast %44 : vector<1x1x128xf32> to vector<8x16x128xf32>
    %46 = arith.mulf %41, %45 : vector<8x16x128xf32>
    %47 = arith.addf %40, %46 : vector<8x16x128xf32>
    %c0_36 = arith.constant 0 : index
    %c9_37 = arith.constant 9 : index
    %c0_38 = arith.constant 0 : index
    %48 = vector.load %arg11[%c0_36, %c9_37, %c0_38] : memref<10x32x128xf32, #tpu.memory_space<vmem>>, vector<8x16x128xf32>
    %49 = vector.extract_strided_slice %34 {offsets = [2, 0], sizes = [1, 128], strides = [1, 1]} : vector<9x128xf32> to vector<1x128xf32>
    %50 = vector.shape_cast %49 : vector<1x128xf32> to vector<128xf32>
    %51 = vector.shape_cast %50 : vector<128xf32> to vector<1x1x128xf32>
    %52 = vector.broadcast %51 : vector<1x1x128xf32> to vector<8x16x128xf32>
    %53 = arith.mulf %48, %52 : vector<8x16x128xf32>
    %54 = arith.addf %47, %53 : vector<8x16x128xf32>
    %c1_39 = arith.constant 1 : index
    %c7_40 = arith.constant 7 : index
    %c0_41 = arith.constant 0 : index
    %55 = vector.load %arg11[%c1_39, %c7_40, %c0_41] : memref<10x32x128xf32, #tpu.memory_space<vmem>>, vector<8x16x128xf32>
    %56 = vector.extract_strided_slice %34 {offsets = [3, 0], sizes = [1, 128], strides = [1, 1]} : vector<9x128xf32> to vector<1x128xf32>
    %57 = vector.shape_cast %56 : vector<1x128xf32> to vector<128xf32>
    %58 = vector.shape_cast %57 : vector<128xf32> to vector<1x1x128xf32>
    %59 = vector.broadcast %58 : vector<1x1x128xf32> to vector<8x16x128xf32>
    %60 = arith.mulf %55, %59 : vector<8x16x128xf32>
    %61 = arith.addf %54, %60 : vector<8x16x128xf32>
    %c1_42 = arith.constant 1 : index
    %c8_43 = arith.constant 8 : index
    %c0_44 = arith.constant 0 : index
    %62 = vector.load %arg11[%c1_42, %c8_43, %c0_44] : memref<10x32x128xf32, #tpu.memory_space<vmem>>, vector<8x16x128xf32>
    %63 = vector.extract_strided_slice %34 {offsets = [4, 0], sizes = [1, 128], strides = [1, 1]} : vector<9x128xf32> to vector<1x128xf32>
    %64 = vector.shape_cast %63 : vector<1x128xf32> to vector<128xf32>
    %65 = vector.shape_cast %64 : vector<128xf32> to vector<1x1x128xf32>
    %66 = vector.broadcast %65 : vector<1x1x128xf32> to vector<8x16x128xf32>
    %67 = arith.mulf %62, %66 : vector<8x16x128xf32>
    %68 = arith.addf %61, %67 : vector<8x16x128xf32>
    %c1_45 = arith.constant 1 : index
    %c9_46 = arith.constant 9 : index
    %c0_47 = arith.constant 0 : index
    %69 = vector.load %arg11[%c1_45, %c9_46, %c0_47] : memref<10x32x128xf32, #tpu.memory_space<vmem>>, vector<8x16x128xf32>
    %70 = vector.extract_strided_slice %34 {offsets = [5, 0], sizes = [1, 128], strides = [1, 1]} : vector<9x128xf32> to vector<1x128xf32>
    %71 = vector.shape_cast %70 : vector<1x128xf32> to vector<128xf32>
    %72 = vector.shape_cast %71 : vector<128xf32> to vector<1x1x128xf32>
    %73 = vector.broadcast %72 : vector<1x1x128xf32> to vector<8x16x128xf32>
    %74 = arith.mulf %69, %73 : vector<8x16x128xf32>
    %75 = arith.addf %68, %74 : vector<8x16x128xf32>
    %c2 = arith.constant 2 : index
    %c7_48 = arith.constant 7 : index
    %c0_49 = arith.constant 0 : index
    %76 = vector.load %arg11[%c2, %c7_48, %c0_49] : memref<10x32x128xf32, #tpu.memory_space<vmem>>, vector<8x16x128xf32>
    %77 = vector.extract_strided_slice %34 {offsets = [6, 0], sizes = [1, 128], strides = [1, 1]} : vector<9x128xf32> to vector<1x128xf32>
    %78 = vector.shape_cast %77 : vector<1x128xf32> to vector<128xf32>
    %79 = vector.shape_cast %78 : vector<128xf32> to vector<1x1x128xf32>
    %80 = vector.broadcast %79 : vector<1x1x128xf32> to vector<8x16x128xf32>
    %81 = arith.mulf %76, %80 : vector<8x16x128xf32>
    %82 = arith.addf %75, %81 : vector<8x16x128xf32>
    %c2_50 = arith.constant 2 : index
    %c8_51 = arith.constant 8 : index
    %c0_52 = arith.constant 0 : index
    %83 = vector.load %arg11[%c2_50, %c8_51, %c0_52] : memref<10x32x128xf32, #tpu.memory_space<vmem>>, vector<8x16x128xf32>
    %84 = vector.extract_strided_slice %34 {offsets = [7, 0], sizes = [1, 128], strides = [1, 1]} : vector<9x128xf32> to vector<1x128xf32>
    %85 = vector.shape_cast %84 : vector<1x128xf32> to vector<128xf32>
    %86 = vector.shape_cast %85 : vector<128xf32> to vector<1x1x128xf32>
    %87 = vector.broadcast %86 : vector<1x1x128xf32> to vector<8x16x128xf32>
    %88 = arith.mulf %83, %87 : vector<8x16x128xf32>
    %89 = arith.addf %82, %88 : vector<8x16x128xf32>
    %c2_53 = arith.constant 2 : index
    %c9_54 = arith.constant 9 : index
    %c0_55 = arith.constant 0 : index
    %90 = vector.load %arg11[%c2_53, %c9_54, %c0_55] : memref<10x32x128xf32, #tpu.memory_space<vmem>>, vector<8x16x128xf32>
    %91 = vector.extract_strided_slice %34 {offsets = [8, 0], sizes = [1, 128], strides = [1, 1]} : vector<9x128xf32> to vector<1x128xf32>
    %92 = vector.shape_cast %91 : vector<1x128xf32> to vector<128xf32>
    %93 = vector.shape_cast %92 : vector<128xf32> to vector<1x1x128xf32>
    %94 = vector.broadcast %93 : vector<1x1x128xf32> to vector<8x16x128xf32>
    %95 = arith.mulf %90, %94 : vector<8x16x128xf32>
    %96 = arith.addf %89, %95 : vector<8x16x128xf32>
    %c0_56 = arith.constant 0 : index
    %c0_57 = arith.constant 0 : index
    %97 = vector.load %arg7[%c0_56, %c0_57] : memref<1x128xf32, #tpu.memory_space<vmem>>, vector<1x128xf32>
    %98 = vector.shape_cast %97 : vector<1x128xf32> to vector<1x1x128xf32>
    %99 = vector.broadcast %98 : vector<1x1x128xf32> to vector<8x16x128xf32>
    %100 = arith.addf %96, %99 : vector<8x16x128xf32>
    %101 = arith.negf %100 : vector<8x16x128xf32>
    %102 = math.exp %101 : vector<8x16x128xf32>
    %cst_58 = arith.constant 1.000000e+00 : f32
    %103 = vector.broadcast %cst_58 : f32 to vector<8x16x128xf32>
    %104 = arith.addf %103, %102 : vector<8x16x128xf32>
    %105 = arith.divf %103, %104 : vector<8x16x128xf32>
    %106 = arith.mulf %100, %105 : vector<8x16x128xf32>
    %107 = vector.shape_cast %106 : vector<8x16x128xf32> to vector<128x128xf32>
    %108 = arith.truncf %107 : vector<128x128xf32> to vector<128x128xbf16>
    %c0_59 = arith.constant 0 : index
    %c0_60 = arith.constant 0 : index
    %109 = vector.load %arg8[%c0_59, %c0_60] : memref<128x128xbf16, #tpu.memory_space<vmem>>, vector<128x128xbf16>
    %cst_61 = arith.constant dense<0.000000e+00> : vector<128x128xf32>
    %110 = tpu.matmul %108, %109, %cst_61 {dimension_numbers = #tpu.dot_dimension_numbers<[1], [0], [0], [1], [0, 0, 1, 1], [], []>} : vector<128x128xbf16>, vector<128x128xbf16>, vector<128x128xf32> -> vector<128x128xf32>
    %c0_62 = arith.constant 0 : index
    %c0_63 = arith.constant 0 : index
    %111 = vector.load %arg9[%c0_62, %c0_63] : memref<1x128xf32, #tpu.memory_space<vmem>>, vector<1x128xf32>
    %112 = vector.broadcast %111 : vector<1x128xf32> to vector<128x128xf32>
    %113 = arith.addf %110, %112 : vector<128x128xf32>
    %114 = arith.extf %1 : vector<128x128xbf16> to vector<128x128xf32>
    %115 = arith.addf %113, %114 : vector<128x128xf32>
    %116 = vector.shape_cast %115 : vector<128x128xf32> to vector<1x8x16x128xf32>
    %c0_64 = arith.constant 0 : index
    %c0_65 = arith.constant 0 : index
    %c0_66 = arith.constant 0 : index
    %c0_67 = arith.constant 0 : index
    %117 = vector.load %arg10[%c0_64, %c0_65, %c0_66, %c0_67] : memref<1x8x16x128xf32, #tpu.memory_space<vmem>>, vector<1x8x16x128xf32>
    tpu.vector_store %arg10[%c0_64, %c0_65, %c0_66, %c0_67], %116 {strides = array<i32>} : memref<1x8x16x128xf32, #tpu.memory_space<vmem>>, vector<1x8x16x128xf32>,
    return
  }
  func.func @transform_0(%arg0: i32, %arg1: i32) -> (i32, i32, i32, i32) {
    %c0_i32 = arith.constant 0 : i32
    %c0_i32_0 = arith.constant 0 : i32
    %c0_i32_1 = arith.constant 0 : i32
    return %arg0, %arg1, %c0_i32, %c0_i32_0 : i32, i32, i32, i32
  }
  func.func @transform_1(%arg0: i32, %arg1: i32) -> (i32, i32, i32, i32, i32) {
    %c0_i32 = arith.constant 0 : i32
    %c0_i32_0 = arith.constant 0 : i32
    %c0_i32_1 = arith.constant 0 : i32
    %c0_i32_2 = arith.constant 0 : i32
    return %arg0, %arg1, %c0_i32, %c0_i32_0, %c0_i32_1 : i32, i32, i32, i32, i32
  }
  func.func @transform_2(%arg0: i32, %arg1: i32) -> (i32, i32) {
    %c0_i32 = arith.constant 0 : i32
    %c0_i32_0 = arith.constant 0 : i32
    %c0_i32_1 = arith.constant 0 : i32
    return %c0_i32, %c0_i32_0 : i32, i32
  }
  func.func @transform_3(%arg0: i32, %arg1: i32) -> (i32, i32) {
    %c0_i32 = arith.constant 0 : i32
    %c0_i32_0 = arith.constant 0 : i32
    %c0_i32_1 = arith.constant 0 : i32
    return %c0_i32, %c0_i32_0 : i32, i32
  }
  func.func @transform_4(%arg0: i32, %arg1: i32) -> (i32, i32) {
    %c0_i32 = arith.constant 0 : i32
    %c0_i32_0 = arith.constant 0 : i32
    %c0_i32_1 = arith.constant 0 : i32
    return %c0_i32, %c0_i32_0 : i32, i32
  }
  func.func @transform_5(%arg0: i32, %arg1: i32) -> (i32, i32) {
    %c0_i32 = arith.constant 0 : i32
    %c0_i32_0 = arith.constant 0 : i32
    %c0_i32_1 = arith.constant 0 : i32
    return %c0_i32, %c0_i32_0 : i32, i32
  }
  func.func @transform_6(%arg0: i32, %arg1: i32) -> (i32, i32) {
    %c0_i32 = arith.constant 0 : i32
    %c0_i32_0 = arith.constant 0 : i32
    %c0_i32_1 = arith.constant 0 : i32
    return %c0_i32, %c0_i32_0 : i32, i32
  }
  func.func @transform_7(%arg0: i32, %arg1: i32) -> (i32, i32) {
    %c0_i32 = arith.constant 0 : i32
    %c0_i32_0 = arith.constant 0 : i32
    %c0_i32_1 = arith.constant 0 : i32
    return %c0_i32, %c0_i32_0 : i32, i32
  }
  func.func @transform_8(%arg0: i32, %arg1: i32) -> (i32, i32, i32, i32) {
    %c0_i32 = arith.constant 0 : i32
    %c0_i32_0 = arith.constant 0 : i32
    %c0_i32_1 = arith.constant 0 : i32
    return %arg0, %arg1, %c0_i32, %c0_i32_0 : i32, i32, i32, i32
  }
}

</mosaic_0001>

<llo_original>
// kernel: inverted_residual_pallas.1
$region0: #{inverted_residual_pallas.1}
  #allocation0 [shape = 'u32[]', space=smem, size = 0x4, offset = 0x4, fixed_abs, tag = 'smem constant byte address 0x4 - core index']
  #allocation1 [shape = 'u32[144,128]{1,0:T(1,128)}', space=vmem, size = 0x12000, scoped, tag = 'internal scratch']
  #allocation2 [shape = 'f32[10,32,128]{2,1,0:T(8,128)}', space=vmem, size = 0x28000, scoped, tag = 'scratch operand']
  %s0 = inlined_call_operand.vmem [shape: bf16[2,16,16,128], index: 0, kind: input, shape index: {}]
  %s1 = inlined_call_operand.vmem [shape: bf16[2,2,2,16,128], index: 1, kind: input, shape index: {}]
  %s2 = inlined_call_operand.vmem [shape: bf16[128,128], index: 2, kind: input, shape index: {}]
  %s3 = inlined_call_operand.vmem [shape: f32[1,128], index: 3, kind: input, shape index: {}]
  %s4 = inlined_call_operand.vmem [shape: f32[9,128], index: 4, kind: input, shape index: {}]
  %s5 = inlined_call_operand.vmem [shape: f32[1,128], index: 5, kind: input, shape index: {}]
  %s6 = inlined_call_operand.vmem [shape: bf16[128,128], index: 6, kind: input, shape index: {}]
  %s7 = inlined_call_operand.vmem [shape: f32[1,128], index: 7, kind: input, shape index: {}]
  %s8 = inlined_call_operand.vmem [shape: f32[2,16,16,128], index: 8, kind: output, shape index: {}]
  %s9 = sld [smem:[#allocation0]]
  $region65: #{inverted_residual_pallas.1} parent=0
    _
  %s11 = ssub.s32 1, %s9
  %s12 = scalar_select 0, %s11, %s9
  loop: start=0, step=1, limit=6
  $region2: #{inverted_residual_pallas.1} parent=0 // loop_pre_header
    _
  $region3: #{inverted_residual_pallas.1} parent=0 // loop_header
    %s14 = sphi 0, %s18
    %p15 = scmp.ge.s32.totalorder %s14, 6
    %s21 = sphi 0, %s33
    %s22 = sphi 0, %s29
    %s23 = sphi 0, %s21
    %s24 = sphi 0, %s22
    %s25 = sphi 0, %s23
    %s26 = sphi 0, %s24
    %s38 = sphi 0, %s40
    %s41 = sphi 0, %s38
    %s42 = sphi 0, %s41
    %s58 = sphi 0, %s42
    %s66 = sphi 0, %s68
    %s69 = sphi 0, %s66
    %s70 = sphi 0, %s69
    %s86 = sphi 0, %s70
    %s90 = sphi 0, %s90
    %s92 = sphi 0, %s90
    %s93 = sphi 0, %s92
    %s107 = sphi 0, %s93
    %s111 = sphi 0, %s111
    %s113 = sphi 0, %s111
    %s114 = sphi 0, %s113
    %s128 = sphi 0, %s114
    %s132 = sphi 0, %s132
    %s134 = sphi 0, %s132
    %s135 = sphi 0, %s134
    %s149 = sphi 0, %s135
    %s153 = sphi 0, %s153
    %s155 = sphi 0, %s153
    %s156 = sphi 0, %s155
    %s170 = sphi 0, %s156
    %s174 = sphi 0, %s174
    %s176 = sphi 0, %s174
    %s177 = sphi 0, %s176
    %s191 = sphi 0, %s177
    %s195 = sphi 0, %s195
    %s197 = sphi 0, %s195
    %s198 = sphi 0, %s197
    %s212 = sphi 0, %s198
    %s220 = sphi 0, %s222
    %s223 = sphi 0, %s220
    %s224 = sphi 0, %s223
    %s240 = sphi 0, %s224
  $region4: #{inverted_residual_pallas.1} parent=0 // loop_header_branch
    %17 = sbr.rel (%p15) target = $region8
  $region5: #{inverted_residual_pallas.1} parent=0 // loop_body
    %s19 = ssub.s32 %s14, 1
    %s20 = ssub.s32 %s14, 2
    %s27 = sadd.s32 1, %s22
    %p28 = scmp.ge.s32.totalorder %s27, 2
    %s29 = scalar_select %p28, 0, %s27
    %s30 = sadd.s32 1, %s21
    %s31 = scalar_select %p28, %s30, %s21
    %p32 = scmp.ge.s32.totalorder %s31, 2
    %s33 = scalar_select %p32, 0, %s31
    %s34 = ssub.s32 %s21, %s33
    %s35 = ssub.s32 %s22, %s29
    %s36 = sor.u32 %s34, %s35
    %p37 = scmp.eq.s32.totalorder %s36, 0
    %s39 = sadd.s32 %s38, 1
    %s40 = scalar_select %p37, %s38, %s39
    %p43 = pneg %p37
    %p44 = scmp.eq.s32.totalorder %s14, 3
    %p45 = por %p43, %p44
    %p46 = scmp.ne.s32.totalorder %s38, %s41
    %p47 = scmp.eq.s32.totalorder %s14, 0
    %p48 = por %p46, %p47
    %p49 = scmp.ne.s32.totalorder %s38, %s41
    %p50 = scmp.eq.s32.totalorder %s19, 3
    %p51 = por %p49, %p50
    %p52 = scmp.ne.s32.totalorder %s41, %s42
    %p53 = scmp.eq.s32.totalorder %s19, 0
    %p54 = por %p52, %p53
    %p55 = scmp.ne.s32.totalorder %s41, %s42
    %p56 = scmp.eq.s32.totalorder %s20, 3
    %p57 = por %p55, %p56
    %p59 = scmp.ne.s32.totalorder %s42, %s58
    %p60 = scmp.eq.s32.totalorder %s20, 0
    %p61 = por %p59, %p60
    %s62 = ssub.s32 %s21, %s33
    %s63 = ssub.s32 %s22, %s29
    %s64 = sor.u32 %s62, %s63
    %p65 = scmp.eq.s32.totalorder %s64, 0
    %s67 = sadd.s32 %s66, 1
    %s68 = scalar_select %p65, %s66, %s67
    %p71 = pneg %p65
    %p72 = scmp.eq.s32.totalorder %s14, 3
    %p73 = por %p71, %p72
    %p74 = scmp.ne.s32.totalorder %s66, %s69
    %p75 = scmp.eq.s32.totalorder %s14, 0
    %p76 = por %p74, %p75
    %p77 = scmp.ne.s32.totalorder %s66, %s69
    %p78 = scmp.eq.s32.totalorder %s19, 3
    %p79 = por %p77, %p78
    %p80 = scmp.ne.s32.totalorder %s69, %s70
    %p81 = scmp.eq.s32.totalorder %s19, 0
    %p82 = por %p80, %p81
    %p83 = scmp.ne.s32.totalorder %s69, %s70
    %p84 = scmp.eq.s32.totalorder %s20, 3
    %p85 = por %p83, %p84
    %p87 = scmp.ne.s32.totalorder %s70, %s86
    %p88 = scmp.eq.s32.totalorder %s20, 0
    %p89 = por %p87, %p88
    %s91 = sadd.s32 %s90, 1
    %p94 = scmp.eq.s32.totalorder %s14, 3
    %p95 = scmp.ne.s32.totalorder %s90, %s92
    %p96 = scmp.eq.s32.totalorder %s14, 0
    %p97 = por %p95, %p96
    %p98 = scmp.ne.s32.totalorder %s90, %s92
    %p99 = scmp.eq.s32.totalorder %s19, 3
    %p100 = por %p98, %p99
    %p101 = scmp.ne.s32.totalorder %s92, %s93
    %p102 = scmp.eq.s32.totalorder %s19, 0
    %p103 = por %p101, %p102
    %p104 = scmp.ne.s32.totalorder %s92, %s93
    %p105 = scmp.eq.s32.totalorder %s20, 3
    %p106 = por %p104, %p105
    %p108 = scmp.ne.s32.totalorder %s93, %s107
    %p109 = scmp.eq.s32.totalorder %s20, 0
    %p110 = por %p108, %p109
    %s112 = sadd.s32 %s111, 1
    %p115 = scmp.eq.s32.totalorder %s14, 3
    %p116 = scmp.ne.s32.totalorder %s111, %s113
    %p117 = scmp.eq.s32.totalorder %s14, 0
    %p118 = por %p116, %p117
    %p119 = scmp.ne.s32.totalorder %s111, %s113
    %p120 = scmp.eq.s32.totalorder %s19, 3
    %p121 = por %p119, %p120
    %p122 = scmp.ne.s32.totalorder %s113, %s114
    %p123 = scmp.eq.s32.totalorder %s19, 0
    %p124 = por %p122, %p123
    %p125 = scmp.ne.s32.totalorder %s113, %s114
    %p126 = scmp.eq.s32.totalorder %s20, 3
    %p127 = por %p125, %p126
    %p129 = scmp.ne.s32.totalorder %s114, %s128
    %p130 = scmp.eq.s32.totalorder %s20, 0
    %p131 = por %p129, %p130
    %s133 = sadd.s32 %s132, 1
    %p136 = scmp.eq.s32.totalorder %s14, 3
    %p137 = scmp.ne.s32.totalorder %s132, %s134
    %p138 = scmp.eq.s32.totalorder %s14, 0
    %p139 = por %p137, %p138
    %p140 = scmp.ne.s32.totalorder %s132, %s134
    %p141 = scmp.eq.s32.totalorder %s19, 3
    %p142 = por %p140, %p141
    %p143 = scmp.ne.s32.totalorder %s134, %s135
    %p144 = scmp.eq.s32.totalorder %s19, 0
    %p145 = por %p143, %p144
    %p146 = scmp.ne.s32.totalorder %s134, %s135
    %p147 = scmp.eq.s32.totalorder %s20, 3
    %p148 = por %p146, %p147
    %p150 = scmp.ne.s32.totalorder %s135, %s149
    %p151 = scmp.eq.s32.totalorder %s20, 0
    %p152 = por %p150, %p151
    %s154 = sadd.s32 %s153, 1
    %p157 = scmp.eq.s32.totalorder %s14, 3
    %p158 = scmp.ne.s32.totalorder %s153, %s155
    %p159 = scmp.eq.s32.totalorder %s14, 0
    %p160 = por %p158, %p159
    %p161 = scmp.ne.s32.totalorder %s153, %s155
    %p162 = scmp.eq.s32.totalorder %s19, 3
    %p163 = por %p161, %p162
    %p164 = scmp.ne.s32.totalorder %s155, %s156
    %p165 = scmp.eq.s32.totalorder %s19, 0
    %p166 = por %p164, %p165
    %p167 = scmp.ne.s32.totalorder %s155, %s156
    %p168 = scmp.eq.s32.totalorder %s20, 3
    %p169 = por %p167, %p168
    %p171 = scmp.ne.s32.totalorder %s156, %s170
    %p172 = scmp.eq.s32.totalorder %s20, 0
    %p173 = por %p171, %p172
    %s175 = sadd.s32 %s174, 1
    %p178 = scmp.eq.s32.totalorder %s14, 3
    %p179 = scmp.ne.s32.totalorder %s174, %s176
    %p180 = scmp.eq.s32.totalorder %s14, 0
    %p181 = por %p179, %p180
    %p182 = scmp.ne.s32.totalorder %s174, %s176
    %p183 = scmp.eq.s32.totalorder %s19, 3
    %p184 = por %p182, %p183
    %p185 = scmp.ne.s32.totalorder %s176, %s177
    %p186 = scmp.eq.s32.totalorder %s19, 0
    %p187 = por %p185, %p186
    %p188 = scmp.ne.s32.totalorder %s176, %s177
    %p189 = scmp.eq.s32.totalorder %s20, 3
    %p190 = por %p188, %p189
    %p192 = scmp.ne.s32.totalorder %s177, %s191
    %p193 = scmp.eq.s32.totalorder %s20, 0
    %p194 = por %p192, %p193
    %s196 = sadd.s32 %s195, 1
    %p199 = scmp.eq.s32.totalorder %s14, 3
    %p200 = scmp.ne.s32.totalorder %s195, %s197
    %p201 = scmp.eq.s32.totalorder %s14, 0
    %p202 = por %p200, %p201
    %p203 = scmp.ne.s32.totalorder %s195, %s197
    %p204 = scmp.eq.s32.totalorder %s19, 3
    %p205 = por %p203, %p204
    %p206 = scmp.ne.s32.totalorder %s197, %s198
    %p207 = scmp.eq.s32.totalorder %s19, 0
    %p208 = por %p206, %p207
    %p209 = scmp.ne.s32.totalorder %s197, %s198
    %p210 = scmp.eq.s32.totalorder %s20, 3
    %p211 = por %p209, %p210
    %p213 = scmp.ne.s32.totalorder %s198, %s212
    %p214 = scmp.eq.s32.totalorder %s20, 0
    %p215 = por %p213, %p214
    %s216 = ssub.s32 %s21, %s33
    %s217 = ssub.s32 %s22, %s29
    %s218 = sor.u32 %s216, %s217
    %p219 = scmp.eq.s32.totalorder %s218, 0
    %s221 = sadd.s32 %s220, 1
    %s222 = scalar_select %p219, %s220, %s221
    %p225 = pneg %p219
    %p226 = scmp.eq.s32.totalorder %s14, 3
    %p227 = por %p225, %p226
    %p228 = scmp.ne.s32.totalorder %s220, %s223
    %p229 = scmp.eq.s32.totalorder %s14, 0
    %p230 = por %p228, %p229
    %p231 = scmp.ne.s32.totalorder %s220, %s223
    %p232 = scmp.eq.s32.totalorder %s19, 3
    %p233 = por %p231, %p232
    %p234 = scmp.ne.s32.totalorder %s223, %s224
    %p235 = scmp.eq.s32.totalorder %s19, 0
    %p236 = por %p234, %p235
    %p237 = scmp.ne.s32.totalorder %s223, %s224
    %p238 = scmp.eq.s32.totalorder %s20, 3
    %p239 = por %p237, %p238
    %p241 = scmp.ne.s32.totalorder %s224, %s240
    %p242 = scmp.eq.s32.totalorder %s20, 0
    %p243 = por %p241, %p242
    %p244 = scmp.le.s32.totalorder 1, %s14
    %p245 = scmp.lt.s32.totalorder %s14, 5
    %p246 = pnand %p244, %p245
    %p247 = pneg %p246
    // Predicated region
    $region9: #{inverted_residual_pallas.1} parent=5 // pred_check
      _
    $region10: #{inverted_residual_pallas.1} parent=5 // pred_check_branch
      %249 = sbr.rel (%p246) target = $region12
    $region11: #{inverted_residual_pallas.1} parent=5 // pred_region
      %s250 = ssub.s32 %s14, 1
      // Predicated region
      $region13: #{inverted_residual_pallas.1} parent=11 // pred_check
        %p251 = pneg %p103
      $region14: #{inverted_residual_pallas.1} parent=11 // pred_check_branch
        %253 = sbr.rel (%p251) target = $region16
      $region15: #{inverted_residual_pallas.1} parent=11 // pred_region
        _
      $region16: #{inverted_residual_pallas.1} parent=11 // pred_fallthru
        _
      // Predicated region
      $region17: #{inverted_residual_pallas.1} parent=11 // pred_check
        %p254 = pneg %p124
      $region18: #{inverted_residual_pallas.1} parent=11 // pred_check_branch
        %256 = sbr.rel (%p254) target = $region20
      $region19: #{inverted_residual_pallas.1} parent=11 // pred_region
        _
      $region20: #{inverted_residual_pallas.1} parent=11 // pred_fallthru
        _
      // Predicated region
      $region21: #{inverted_residual_pallas.1} parent=11 // pred_check
        %p257 = pneg %p145
      $region22: #{inverted_residual_pallas.1} parent=11 // pred_check_branch
        %259 = sbr.rel (%p257) target = $region24
      $region23: #{inverted_residual_pallas.1} parent=11 // pred_region
        _
      $region24: #{inverted_residual_pallas.1} parent=11 // pred_fallthru
        _
      // Predicated region
      $region25: #{inverted_residual_pallas.1} parent=11 // pred_check
        %p260 = pneg %p166
      $region26: #{inverted_residual_pallas.1} parent=11 // pred_check_branch
        %262 = sbr.rel (%p260) target = $region28
      $region27: #{inverted_residual_pallas.1} parent=11 // pred_region
        _
      $region28: #{inverted_residual_pallas.1} parent=11 // pred_fallthru
        _
      // Predicated region
      $region29: #{inverted_residual_pallas.1} parent=11 // pred_check
        %p263 = pneg %p187
      $region30: #{inverted_residual_pallas.1} parent=11 // pred_check_branch
        %265 = sbr.rel (%p263) target = $region32
      $region31: #{inverted_residual_pallas.1} parent=11 // pred_region
        _
      $region32: #{inverted_residual_pallas.1} parent=11 // pred_fallthru
        _
      // Predicated region
      $region33: #{inverted_residual_pallas.1} parent=11 // pred_check
        %p266 = pneg %p208
      $region34: #{inverted_residual_pallas.1} parent=11 // pred_check_branch
        %268 = sbr.rel (%p266) target = $region36
      $region35: #{inverted_residual_pallas.1} parent=11 // pred_region
        _
      $region36: #{inverted_residual_pallas.1} parent=11 // pred_fallthru
        _
    $region12: #{inverted_residual_pallas.1} parent=5 // pred_fallthru
      _
    %p269 = scmp.lt.s32.totalorder %s14, 4
    // Predicated region
    $region37: #{inverted_residual_pallas.1} parent=5 // pred_check
      %p270 = pneg %p269
    $region38: #{inverted_residual_pallas.1} parent=5 // pred_check_branch
      %272 = sbr.rel (%p270) target = $region40
    $region39: #{inverted_residual_pallas.1} parent=5 // pred_region
      // Predicated region
      $region41: #{inverted_residual_pallas.1} parent=39 // pred_check
        %p273 = pneg %p48
      $region42: #{inverted_residual_pallas.1} parent=39 // pred_check_branch
        %275 = sbr.rel (%p273) target = $region44
      $region43: #{inverted_residual_pallas.1} parent=39 // pred_region
        %s276 = smul.u32 8, %s22
        %p277 = scmp.lt.s32.totalorder %s21, 1
        %s278 = scalar_select %p277, %s21, 1
        %p279 = scmp.lt.s32.totalorder %s276, 15
        %s280 = scalar_select %p279, %s276, 15
        %s281 = smul.addr %s280, 2
        %s282 = smul.addr %s278, 32
        %s283 = sadd.s32 %s281, %s282
        %s284 = smul.addr %s283, 4
        %s285 = scalar_lea.vmem %s0, %s284
        %s286 = smul.u32 8, %s22
      $region44: #{inverted_residual_pallas.1} parent=39 // pred_fallthru
        _
      // Predicated region
      $region45: #{inverted_residual_pallas.1} parent=39 // pred_check
        %p287 = pneg %p76
      $region46: #{inverted_residual_pallas.1} parent=39 // pred_check_branch
        %289 = sbr.rel (%p287) target = $region48
      $region47: #{inverted_residual_pallas.1} parent=39 // pred_region
        %p290 = scmp.lt.s32.totalorder %s21, 1
        %s291 = scalar_select %p290, %s21, 1
        %p292 = scmp.lt.s32.totalorder %s22, 1
        %s293 = scalar_select %p292, %s22, 1
        %s294 = smul.addr %s293, 4
        %s295 = smul.addr %s291, 8
        %s296 = sadd.s32 %s294, %s295
        %s297 = smul.addr %s296, 4
        %s298 = scalar_lea.vmem %s1, %s297
      $region48: #{inverted_residual_pallas.1} parent=39 // pred_fallthru
        _
    $region40: #{inverted_residual_pallas.1} parent=5 // pred_fallthru
      _
    %p299 = scmp.le.s32.totalorder 1, %s14
    %p300 = scmp.lt.s32.totalorder %s14, 5
    %p301 = pnand %p299, %p300
    %p302 = pneg %p301
    // Predicated region
    $region49: #{inverted_residual_pallas.1} parent=5 // pred_check
      _
    $region50: #{inverted_residual_pallas.1} parent=5 // pred_check_branch
      %304 = sbr.rel (%p301) target = $region52
    $region51: #{inverted_residual_pallas.1} parent=5 // pred_region
      %s305 = ssub.s32 %s14, 1
      %s306 = smul.u32 8, %s24
      %p307 = scmp.lt.s32.totalorder %s23, 1
      %s308 = scalar_select %p307, %s23, 1
      %p309 = scmp.lt.s32.totalorder %s306, 15
      %s310 = scalar_select %p309, %s306, 15
      %s311 = smul.addr %s310, 2
      %s312 = smul.addr %s308, 32
      %s313 = sadd.s32 %s311, %s312
      %s314 = smul.addr %s313, 4
      %s315 = scalar_lea.vmem %s0, %s314
      %p316 = pneg %p54
      %p317 = pneg %p51
      %p318 = scmp.lt.s32.totalorder %s23, 1
      %s319 = scalar_select %p318, %s23, 1
      %p320 = scmp.lt.s32.totalorder %s24, 1
      %s321 = scalar_select %p320, %s24, 1
      %s322 = smul.addr %s321, 4
      %s323 = smul.addr %s319, 8
      %s324 = sadd.s32 %s322, %s323
      %s325 = smul.addr %s324, 4
      %s326 = scalar_lea.vmem %s1, %s325
      %p327 = pneg %p82
      %p328 = pneg %p79
      %p329 = pneg %p103
      %p330 = pneg %p100
      %p331 = pneg %p124
      %p332 = pneg %p121
      %p333 = pneg %p145
      %p334 = pneg %p142
      %p335 = pneg %p166
      %p336 = pneg %p163
      %p337 = pneg %p187
      %p338 = pneg %p184
      %p339 = pneg %p208
      %p340 = pneg %p205
      %p341 = pneg %p236
      %p342 = pneg %p233
      %s343 = smul.u32 8, %s24
      %p344 = scmp.lt.s32.totalorder %s23, 1
      %s345 = scalar_select %p344, %s23, 1
      %p346 = scmp.lt.s32.totalorder %s343, 15
      %s347 = scalar_select %p346, %s343, 15
      %s348 = smul.addr %s347, 2
      %s349 = smul.addr %s345, 32
      %s350 = sadd.s32 %s348, %s349
      %s351 = smul.addr %s350, 8
      %s352 = scalar_lea.vmem %s8, %s351
      %s353 = smul.u32 8, %s24
      %p354 = scmp.lt.s32.totalorder %s23, 1
      %s355 = scalar_select %p354, %s23, 1
      %p356 = scmp.lt.s32.totalorder %s353, 15
      %s357 = scalar_select %p356, %s353, 15
      %s358 = smul.addr %s357, 2
      %s359 = smul.addr %s355, 32
      %s360 = sadd.s32 %s358, %s359
      %s361 = smul.addr %s360, 4
      %s362 = scalar_lea.vmem %s0, %s361
      %s363 = smul.u32 8, %s24
      %p364 = scmp.lt.s32.totalorder %s23, 1
      %s365 = scalar_select %p364, %s23, 1
      %p366 = scmp.lt.s32.totalorder %s24, 1
      %s367 = scalar_select %p366, %s24, 1
      %s368 = smul.addr %s367, 4
      %s369 = smul.addr %s365, 8
      %s370 = sadd.s32 %s368, %s369
      %s371 = smul.addr %s370, 4
      %s372 = scalar_lea.vmem %s1, %s371
      %s373 = smul.u32 8, %s24
      %p374 = scmp.lt.s32.totalorder %s23, 1
      %s375 = scalar_select %p374, %s23, 1
      %p376 = scmp.lt.s32.totalorder %s373, 15
      %s377 = scalar_select %p376, %s373, 15
      %s378 = smul.addr %s377, 2
      %s379 = smul.addr %s375, 32
      %s380 = sadd.s32 %s378, %s379
      %s381 = smul.addr %s380, 8
      %s382 = scalar_lea.vmem %s8, %s381
      %s383 = smul.u32 8, %s24
      %v385 = vld [vmem:[%s362] sm:$0xf]
      %v386 = vld [vmem:[%s362 + $0x4] sm:$0xf]
      %v387 = vld [vmem:[%s362 + $0x8] sm:$0xf]
      %v388 = vld [vmem:[%s362 + $0xc] sm:$0xf]
      %v389 = vld [vmem:[%s362 + $0x10] sm:$0xf]
      %v390 = vld [vmem:[%s362 + $0x14] sm:$0xf]
      %v391 = vld [vmem:[%s362 + $0x18] sm:$0xf]
      %v392 = vld [vmem:[%s362 + $0x1c] sm:$0xf]
      %v393 = vld [vmem:[%s362 + $0x20] sm:$0xf]
      %v394 = vld [vmem:[%s362 + $0x24] sm:$0xf]
      %v395 = vld [vmem:[%s362 + $0x28] sm:$0xf]
      %v396 = vld [vmem:[%s362 + $0x2c] sm:$0xf]
      %v397 = vld [vmem:[%s362 + $0x30] sm:$0xf]
      %v398 = vld [vmem:[%s362 + $0x34] sm:$0xf]
      %v399 = vld [vmem:[%s362 + $0x38] sm:$0xf]
      %v400 = vld [vmem:[%s362 + $0x3c] sm:$0xf]
      %v401 = vld [vmem:[%s372] sm:$0xf]
      %v402 = vld [vmem:[%s372 + $0x4] sm:$0xf]
      %v403 = vld [vmem:[%s372 + $0x8] sm:$0xf]
      %v404 = vld [vmem:[%s372 + $0xc] sm:$0xf]
      %v405 = vld [vmem:[%s2] sm:$0xf]
      %v406 = vld [vmem:[%s2 + $0x4] sm:$0xf]
      %v407 = vld [vmem:[%s2 + $0x8] sm:$0xf]
      %v408 = vld [vmem:[%s2 + $0xc] sm:$0xf]
      %v409 = vld [vmem:[%s2 + $0x10] sm:$0xf]
      %v410 = vld [vmem:[%s2 + $0x14] sm:$0xf]
      %v411 = vld [vmem:[%s2 + $0x18] sm:$0xf]
      %v412 = vld [vmem:[%s2 + $0x1c] sm:$0xf]
      %v413 = vld [vmem:[%s2 + $0x20] sm:$0xf]
      %v414 = vld [vmem:[%s2 + $0x24] sm:$0xf]
      %v415 = vld [vmem:[%s2 + $0x28] sm:$0xf]
      %v416 = vld [vmem:[%s2 + $0x2c] sm:$0xf]
      %v417 = vld [vmem:[%s2 + $0x30] sm:$0xf]
      %v418 = vld [vmem:[%s2 + $0x34] sm:$0xf]
      %v419 = vld [vmem:[%s2 + $0x38] sm:$0xf]
      %v420 = vld [vmem:[%s2 + $0x3c] sm:$0xf]
      %v421 = vld [vmem:[%s3] sm:$0x1]
      %v423 = vlaneseq
      %v424 = vshrl.u32 %v423, 7
      %v425 = vsub.s32 0, %v424
      %v426 = vrot.slane %v421, %v425
      %v444 = vunpack.c.l.b16 %v385
      %v445 = vunpack.c.l.b16 %v386
      %v446 = vunpack.c.l.b16 %v387
      %v447 = vunpack.c.l.b16 %v388
      %v448 = vunpack.c.l.b16 %v389
      %v449 = vunpack.c.l.b16 %v390
      %v450 = vunpack.c.l.b16 %v391
      %v451 = vunpack.c.l.b16 %v392
      %v452 = vunpack.c.l.b16 %v393
      %v453 = vunpack.c.l.b16 %v394
      %v454 = vunpack.c.l.b16 %v395
      %v455 = vunpack.c.l.b16 %v396
      %v456 = vunpack.c.l.b16 %v397
      %v457 = vunpack.c.l.b16 %v398
      %v458 = vunpack.c.l.b16 %v399
      %v459 = vunpack.c.l.b16 %v400
      %v460 = vpack.c.b16 %v445, %v444
      %v461 = vpack.c.b16 %v447, %v446
      %v462 = vpack.c.b16 %v449, %v448
      %v463 = vpack.c.b16 %v451, %v450
      %v464 = vpack.c.b16 %v453, %v452
      %v465 = vpack.c.b16 %v455, %v454
      %v466 = vpack.c.b16 %v457, %v456
      %v467 = vpack.c.b16 %v459, %v458
      %v492 = vunpack.c.l.b16 %v405
      %v493 = vunpack.c.l.b16 %v406
      %v494 = vunpack.c.l.b16 %v407
      %v495 = vunpack.c.l.b16 %v408
      %v496 = vunpack.c.l.b16 %v409
      %v497 = vunpack.c.l.b16 %v410
      %v498 = vunpack.c.l.b16 %v411
      %v499 = vunpack.c.l.b16 %v412
      %v500 = vunpack.c.l.b16 %v413
      %v501 = vunpack.c.l.b16 %v414
      %v502 = vunpack.c.l.b16 %v415
      %v503 = vunpack.c.l.b16 %v416
      %v504 = vunpack.c.l.b16 %v417
      %v505 = vunpack.c.l.b16 %v418
      %v506 = vunpack.c.l.b16 %v419
      %v507 = vunpack.c.l.b16 %v420
      %v508 = vpack.c.b16 %v493, %v492
      %v509 = vpack.c.b16 %v495, %v494
      %v510 = vpack.c.b16 %v497, %v496
      %v511 = vpack.c.b16 %v499, %v498
      %v512 = vpack.c.b16 %v501, %v500
      %v513 = vpack.c.b16 %v503, %v502
      %v514 = vpack.c.b16 %v505, %v504
      %v515 = vpack.c.b16 %v507, %v506
      %524 = vmatprep.subr.bf16.mxu0 0
      %525 = vmatpush1.bf16.msra.mxu0 %v515
      %526 = vmatprep.subr.bf16.mxu0 0
      %527 = vmatpush1.bf16.msra.mxu0 %v514
      %528 = vmatprep.subr.bf16.mxu0 0
      %529 = vmatpush1.bf16.msra.mxu0 %v513
      %530 = vmatprep.subr.bf16.mxu0 0
      %531 = vmatpush1.bf16.msra.mxu0 %v512
      %532 = vmatprep.subr.bf16.mxu0 0
      %533 = vmatpush1.bf16.msra.mxu0 %v511
      %534 = vmatprep.subr.bf16.mxu0 0
      %535 = vmatpush1.bf16.msra.mxu0 %v510
      %536 = vmatprep.subr.bf16.mxu0 0
      %537 = vmatpush1.bf16.msra.mxu0 %v509
      %538 = vmatprep.subr.bf16.mxu0 0
      %539 = vmatpush1.bf16.msra.mxu0 %v508
      %540 = vmatprep.subr.bf16.mxu0 0
      %541 = vmatpush2.bf16.msra.mxu0 0
      %542 = vmatprep.subr.bf16.mxu0 0
      %543 = vmatpush2.bf16.msra.mxu0 0
      %544 = vmatprep.subr.bf16.mxu0 0
      %545 = vmatpush2.bf16.msra.mxu0 0
      %546 = vmatprep.subr.bf16.mxu0 0
      %547 = vmatpush2.bf16.msra.mxu0 0
      %548 = vmatprep.subr.bf16.mxu0 0
      %549 = vmatpush2.bf16.msra.mxu0 0
      %550 = vmatprep.subr.bf16.mxu0 0
      %551 = vmatpush2.bf16.msra.mxu0 0
      %552 = vmatprep.subr.bf16.mxu0 0
      %553 = vmatpush2.bf16.msra.mxu0 0
      %554 = vmatprep.subr.bf16.mxu0 0
      %555 = vmatpush2.bf16.msra.mxu0 0
      %556 = vmatprep.mubr.bf16.mxu0 0
      %557 = vmatmul.mubr.bf16.gmra.mxu0 %v460
      %v558 = vpop.f32.mrf.mxu0
      %v559 = vadd.f32 %v426, %v558
      %v560 = vpop.f32.mrf.mxu0
      %v561 = vpop.f32.mrf.mxu0
      %v562 = vadd.f32 %v426, %v561
      %v563 = vpop.f32.mrf.mxu0
      %564 = vmatprep.mubr.bf16.mxu0 0
      %565 = vmatmul.mubr.bf16.gmra.mxu0 %v461
      %v566 = vpop.f32.mrf.mxu0
      %v567 = vadd.f32 %v426, %v566
      %v568 = vpop.f32.mrf.mxu0
      %v569 = vpop.f32.mrf.mxu0
      %v570 = vadd.f32 %v426, %v569
      %v571 = vpop.f32.mrf.mxu0
      %572 = vmatprep.mubr.bf16.mxu0 0
      %573 = vmatmul.mubr.bf16.gmra.mxu0 %v462
      %v574 = vpop.f32.mrf.mxu0
      %v575 = vadd.f32 %v426, %v574
      %v576 = vpop.f32.mrf.mxu0
      %v577 = vpop.f32.mrf.mxu0
      %v578 = vadd.f32 %v426, %v577
      %v579 = vpop.f32.mrf.mxu0
      %580 = vmatprep.mubr.bf16.mxu0 0
      %581 = vmatmul.mubr.bf16.gmra.mxu0 %v463
      %v582 = vpop.f32.mrf.mxu0
      %v583 = vadd.f32 %v426, %v582
      %v584 = vpop.f32.mrf.mxu0
      %v585 = vpop.f32.mrf.mxu0
      %v586 = vadd.f32 %v426, %v585
      %v587 = vpop.f32.mrf.mxu0
      %588 = vmatprep.mubr.bf16.mxu0 0
      %589 = vmatmul.mubr.bf16.gmra.mxu0 %v464
      %v590 = vpop.f32.mrf.mxu0
      %v591 = vadd.f32 %v426, %v590
      %v592 = vpop.f32.mrf.mxu0
      %v593 = vpop.f32.mrf.mxu0
      %v594 = vadd.f32 %v426, %v593
      %v595 = vpop.f32.mrf.mxu0
      %596 = vmatprep.mubr.bf16.mxu0 0
      %597 = vmatmul.mubr.bf16.gmra.mxu0 %v465
      %v598 = vpop.f32.mrf.mxu0
      %v599 = vadd.f32 %v426, %v598
      %v600 = vpop.f32.mrf.mxu0
      %v601 = vpop.f32.mrf.mxu0
      %v602 = vadd.f32 %v426, %v601
      %v603 = vpop.f32.mrf.mxu0
      %604 = vmatprep.mubr.bf16.mxu0 0
      %605 = vmatmul.mubr.bf16.gmra.mxu0 %v466
      %v606 = vpop.f32.mrf.mxu0
      %v607 = vadd.f32 %v426, %v606
      %v608 = vpop.f32.mrf.mxu0
      %v609 = vpop.f32.mrf.mxu0
      %v610 = vadd.f32 %v426, %v609
      %v611 = vpop.f32.mrf.mxu0
      %612 = vmatprep.mubr.bf16.mxu0 0
      %613 = vmatmul.mubr.bf16.gmra.mxu0 %v467
      %v614 = vpop.f32.mrf.mxu0
      %v615 = vadd.f32 %v426, %v614
      %v616 = vpop.f32.mrf.mxu0
      %v617 = vpop.f32.mrf.mxu0
      %v618 = vadd.f32 %v426, %v617
      %v619 = vpop.f32.mrf.mxu0
      %620 = vdwg.mxu0
      %v625 = vunpack.c.l.b16 %v401
      %v626 = vunpack.c.l.b16 %v402
      %v627 = vunpack.c.l.b16 %v403
      %v628 = vunpack.c.l.b16 %v404
      %v629 = vpack.c.b16 %v626, %v625
      %v630 = vpack.c.b16 %v628, %v627
      %633 = vmatprep.subr.bf16.mxu0 0
      %634 = vmatpush1.bf16.msra.mxu0 %v515
      %635 = vmatprep.subr.bf16.mxu0 0
      %636 = vmatpush1.bf16.msra.mxu0 %v514
      %637 = vmatprep.subr.bf16.mxu0 0
      %638 = vmatpush1.bf16.msra.mxu0 %v513
      %639 = vmatprep.subr.bf16.mxu0 0
      %640 = vmatpush1.bf16.msra.mxu0 %v512
      %641 = vmatprep.subr.bf16.mxu0 0
      %642 = vmatpush1.bf16.msra.mxu0 %v511
      %643 = vmatprep.subr.bf16.mxu0 0
      %644 = vmatpush1.bf16.msra.mxu0 %v510
      %645 = vmatprep.subr.bf16.mxu0 0
      %646 = vmatpush1.bf16.msra.mxu0 %v509
      %647 = vmatprep.subr.bf16.mxu0 0
      %648 = vmatpush1.bf16.msra.mxu0 %v508
      %649 = vmatprep.subr.bf16.mxu0 0
      %650 = vmatpush2.bf16.msra.mxu0 0
      %651 = vmatprep.subr.bf16.mxu0 0
      %652 = vmatpush2.bf16.msra.mxu0 0
      %653 = vmatprep.subr.bf16.mxu0 0
      %654 = vmatpush2.bf16.msra.mxu0 0
      %655 = vmatprep.subr.bf16.mxu0 0
      %656 = vmatpush2.bf16.msra.mxu0 0
      %657 = vmatprep.subr.bf16.mxu0 0
      %658 = vmatpush2.bf16.msra.mxu0 0
      %659 = vmatprep.subr.bf16.mxu0 0
      %660 = vmatpush2.bf16.msra.mxu0 0
      %661 = vmatprep.subr.bf16.mxu0 0
      %662 = vmatpush2.bf16.msra.mxu0 0
      %663 = vmatprep.subr.bf16.mxu0 0
      %664 = vmatpush2.bf16.msra.mxu0 0
      %665 = vmatprep.mubr.bf16.mxu0 0
      %666 = vmatmul.mubr.bf16.gmra.mxu0 %v629
      %v667 = vpop.f32.mrf.mxu0
      %v668 = vadd.f32 %v426, %v667
      %v669 = vpop.f32.mrf.mxu0
      %v670 = vpop.f32.mrf.mxu0
      %v671 = vadd.f32 %v426, %v670
      %v672 = vpop.f32.mrf.mxu0
      %673 = vmatprep.mubr.bf16.mxu0 0
      %674 = vmatmul.mubr.bf16.gmra.mxu0 %v630
      %v675 = vpop.f32.mrf.mxu0
      %v676 = vadd.f32 %v426, %v675
      %v677 = vpop.f32.mrf.mxu0
      %v678 = vpop.f32.mrf.mxu0
      %v679 = vadd.f32 %v426, %v678
      %v680 = vpop.f32.mrf.mxu0
      %681 = vdwg.mxu0
      %p682 = scmp.gt.s32.totalorder %s24, 0
      %s683 = scalar_select %p682, 1, 0
      %s684 = scvt.s32.f32 %s683
      %p685 = scmp.lt.s32.totalorder %s24, 1
      %s686 = scalar_select %p685, 1, 0
      %s687 = scvt.s32.f32 %s686
      %688 = vst [vmem:[#allocation2] sm:$0xff] 0.0
      %689 = vst [vmem:[#allocation2 + $0x20] sm:$0xff] 0.0
      %690 = vst [vmem:[#allocation2 + $0x40] sm:$0xff] 0.0
      %691 = vst [vmem:[#allocation2 + $0x60] sm:$0xff] 0.0
      %692 = vst [vmem:[#allocation2 + $0x80] sm:$0xff] 0.0
      %693 = vst [vmem:[#allocation2 + $0xa0] sm:$0xff] 0.0
      %694 = vst [vmem:[#allocation2 + $0xc0] sm:$0xff] 0.0
      %695 = vst [vmem:[#allocation2 + $0xe0] sm:$0xff] 0.0
      %696 = vst [vmem:[#allocation2 + $0x100] sm:$0xff] 0.0
      %697 = vst [vmem:[#allocation2 + $0x120] sm:$0xff] 0.0
      %698 = vst [vmem:[#allocation2 + $0x18] sm:$0xff] 0.0
      %699 = vst [vmem:[#allocation2 + $0x38] sm:$0xff] 0.0
      %700 = vst [vmem:[#allocation2 + $0x58] sm:$0xff] 0.0
      %701 = vst [vmem:[#allocation2 + $0x78] sm:$0xff] 0.0
      %702 = vst [vmem:[#allocation2 + $0x98] sm:$0xff] 0.0
      %703 = vst [vmem:[#allocation2 + $0xb8] sm:$0xff] 0.0
      %704 = vst [vmem:[#allocation2 + $0xd8] sm:$0xff] 0.0
      %705 = vst [vmem:[#allocation2 + $0xf8] sm:$0xff] 0.0
      %706 = vst [vmem:[#allocation2 + $0x118] sm:$0xff] 0.0
      %707 = vst [vmem:[#allocation2 + $0x138] sm:$0xff] 0.0
      %v708 = vstv %s684
      %v709 = vmul.f32 %v668, %v708
      %v710 = vmul.f32 %v671, %v708
      %711 = vst [vmem:[#allocation2 + $0x8] sm:$0xff] %v709
      %712 = vst [vmem:[#allocation2 + $0x10] sm:$0xff] %v710
      %s713 = scalar_lea.vmem [#allocation2], 32
      %714 = vst [vmem:[%s713 + $0x8] sm:$0xff] %v559
      %715 = vst [vmem:[%s713 + $0x10] sm:$0xff] %v562
      %716 = vst [vmem:[%s713 + $0x28] sm:$0xff] %v567
      %717 = vst [vmem:[%s713 + $0x30] sm:$0xff] %v570
      %718 = vst [vmem:[%s713 + $0x48] sm:$0xff] %v575
      %719 = vst [vmem:[%s713 + $0x50] sm:$0xff] %v578
      %720 = vst [vmem:[%s713 + $0x68] sm:$0xff] %v583
      %721 = vst [vmem:[%s713 + $0x70] sm:$0xff] %v586
      %722 = vst [vmem:[%s713 + $0x88] sm:$0xff] %v591
      %723 = vst [vmem:[%s713 + $0x90] sm:$0xff] %v594
      %724 = vst [vmem:[%s713 + $0xa8] sm:$0xff] %v599
      %725 = vst [vmem:[%s713 + $0xb0] sm:$0xff] %v602
      %726 = vst [vmem:[%s713 + $0xc8] sm:$0xff] %v607
      %727 = vst [vmem:[%s713 + $0xd0] sm:$0xff] %v610
      %728 = vst [vmem:[%s713 + $0xe8] sm:$0xff] %v615
      %729 = vst [vmem:[%s713 + $0xf0] sm:$0xff] %v618
      %v730 = vstv %s687
      %v731 = vmul.f32 %v676, %v730
      %v732 = vmul.f32 %v679, %v730
      %s733 = scalar_lea.vmem [#allocation2], 288
      %734 = vst [vmem:[%s733 + $0x8] sm:$0xff] %v731
      %735 = vst [vmem:[%s733 + $0x10] sm:$0xff] %v732
      %v736 = vld [vmem:[%s4] sm:$0xff]
      %v737 = vld [vmem:[%s4 + $0x8] sm:$0x1]
      %v738 = vld [vmem:[#allocation2 + $0x7] sm:$0xff]
      %v739 = vld [vmem:[#allocation2 + $0xf] sm:$0xff]
      %v740 = vld [vmem:[#allocation2 + $0x27] sm:$0xff]
      %v741 = vld [vmem:[#allocation2 + $0x2f] sm:$0xff]
      %v742 = vld [vmem:[#allocation2 + $0x47] sm:$0xff]
      %v743 = vld [vmem:[#allocation2 + $0x4f] sm:$0xff]
      %v744 = vld [vmem:[#allocation2 + $0x67] sm:$0xff]
      %v745 = vld [vmem:[#allocation2 + $0x6f] sm:$0xff]
      %v746 = vld [vmem:[#allocation2 + $0x87] sm:$0xff]
      %v747 = vld [vmem:[#allocation2 + $0x8f] sm:$0xff]
      %v748 = vld [vmem:[#allocation2 + $0xa7] sm:$0xff]
      %v749 = vld [vmem:[#allocation2 + $0xaf] sm:$0xff]
      %v750 = vld [vmem:[#allocation2 + $0xc7] sm:$0xff]
      %v751 = vld [vmem:[#allocation2 + $0xcf] sm:$0xff]
      %v752 = vld [vmem:[#allocation2 + $0xe7] sm:$0xff]
      %v753 = vld [vmem:[#allocation2 + $0xef] sm:$0xff]
      %v754 = vlaneseq
      %v755 = vshrl.u32 %v754, 7
      %v756 = vsub.s32 0, %v755
      %v757 = vrot.slane %v736, %v756
      %v758 = vmul.f32 %v738, %v757
      %v759 = vmul.f32 %v739, %v757
      %v760 = vmul.f32 %v740, %v757
      %v761 = vmul.f32 %v741, %v757
      %v762 = vmul.f32 %v742, %v757
      %v763 = vmul.f32 %v743, %v757
      %v764 = vmul.f32 %v744, %v757
      %v765 = vmul.f32 %v745, %v757
      %v766 = vmul.f32 %v746, %v757
      %v767 = vmul.f32 %v747, %v757
      %v768 = vmul.f32 %v748, %v757
      %v769 = vmul.f32 %v749, %v757
      %v770 = vmul.f32 %v750, %v757
      %v771 = vmul.f32 %v751, %v757
      %v772 = vmul.f32 %v752, %v757
      %v773 = vmul.f32 %v753, %v757
      %v774 = vld [vmem:[#allocation2 + $0x8] sm:$0xff]
      %v775 = vld [vmem:[#allocation2 + $0x10] sm:$0xff]
      %v776 = vld [vmem:[#allocation2 + $0x28] sm:$0xff]
      %v777 = vld [vmem:[#allocation2 + $0x30] sm:$0xff]
      %v778 = vld [vmem:[#allocation2 + $0x48] sm:$0xff]
      %v779 = vld [vmem:[#allocation2 + $0x50] sm:$0xff]
      %v780 = vld [vmem:[#allocation2 + $0x68] sm:$0xff]
      %v781 = vld [vmem:[#allocation2 + $0x70] sm:$0xff]
      %v782 = vld [vmem:[#allocation2 + $0x88] sm:$0xff]
      %v783 = vld [vmem:[#allocation2 + $0x90] sm:$0xff]
      %v784 = vld [vmem:[#allocation2 + $0xa8] sm:$0xff]
      %v785 = vld [vmem:[#allocation2 + $0xb0] sm:$0xff]
      %v786 = vld [vmem:[#allocation2 + $0xc8] sm:$0xff]
      %v787 = vld [vmem:[#allocation2 + $0xd0] sm:$0xff]
      %v788 = vld [vmem:[#allocation2 + $0xe8] sm:$0xff]
      %v789 = vld [vmem:[#allocation2 + $0xf0] sm:$0xff]
      %v790 = vlaneseq
      %v791 = vshrl.u32 %v790, 7
      %v792 = vsub.s32 1, %v791
      %v793 = vrot.slane %v736, %v792
      %v794 = vmul.f32 %v774, %v793
      %v795 = vmul.f32 %v775, %v793
      %v796 = vmul.f32 %v776, %v793
      %v797 = vmul.f32 %v777, %v793
      %v798 = vmul.f32 %v778, %v793
      %v799 = vmul.f32 %v779, %v793
      %v800 = vmul.f32 %v780, %v793
      %v801 = vmul.f32 %v781, %v793
      %v802 = vmul.f32 %v782, %v793
      %v803 = vmul.f32 %v783, %v793
      %v804 = vmul.f32 %v784, %v793
      %v805 = vmul.f32 %v785, %v793
      %v806 = vmul.f32 %v786, %v793
      %v807 = vmul.f32 %v787, %v793
      %v808 = vmul.f32 %v788, %v793
      %v809 = vmul.f32 %v789, %v793
      %v810 = vadd.f32 %v758, %v794
      %v811 = vadd.f32 %v759, %v795
      %v812 = vadd.f32 %v760, %v796
      %v813 = vadd.f32 %v761, %v797
      %v814 = vadd.f32 %v762, %v798
      %v815 = vadd.f32 %v763, %v799
      %v816 = vadd.f32 %v764, %v800
      %v817 = vadd.f32 %v765, %v801
      %v818 = vadd.f32 %v766, %v802
      %v819 = vadd.f32 %v767, %v803
      %v820 = vadd.f32 %v768, %v804
      %v821 = vadd.f32 %v769, %v805
      %v822 = vadd.f32 %v770, %v806
      %v823 = vadd.f32 %v771, %v807
      %v824 = vadd.f32 %v772, %v808
      %v825 = vadd.f32 %v773, %v809
      %v826 = vld [vmem:[#allocation2 + $0x9] sm:$0xff]
      %v827 = vld [vmem:[#allocation2 + $0x11] sm:$0xff]
      %v828 = vld [vmem:[#allocation2 + $0x29] sm:$0xff]
      %v829 = vld [vmem:[#allocation2 + $0x31] sm:$0xff]
      %v830 = vld [vmem:[#allocation2 + $0x49] sm:$0xff]
      %v831 = vld [vmem:[#allocation2 + $0x51] sm:$0xff]
      %v832 = vld [vmem:[#allocation2 + $0x69] sm:$0xff]
      %v833 = vld [vmem:[#allocation2 + $0x71] sm:$0xff]
      %v834 = vld [vmem:[#allocation2 + $0x89] sm:$0xff]
      %v835 = vld [vmem:[#allocation2 + $0x91] sm:$0xff]
      %v836 = vld [vmem:[#allocation2 + $0xa9] sm:$0xff]
      %v837 = vld [vmem:[#allocation2 + $0xb1] sm:$0xff]
      %v838 = vld [vmem:[#allocation2 + $0xc9] sm:$0xff]
      %v839 = vld [vmem:[#allocation2 + $0xd1] sm:$0xff]
      %v840 = vld [vmem:[#allocation2 + $0xe9] sm:$0xff]
      %v841 = vld [vmem:[#allocation2 + $0xf1] sm:$0xff]
      %v842 = vlaneseq
      %v843 = vshrl.u32 %v842, 7
      %v844 = vsub.s32 2, %v843
      %v845 = vrot.slane %v736, %v844
      %v846 = vmul.f32 %v826, %v845
      %v847 = vmul.f32 %v827, %v845
      %v848 = vmul.f32 %v828, %v845
      %v849 = vmul.f32 %v829, %v845
      %v850 = vmul.f32 %v830, %v845
      %v851 = vmul.f32 %v831, %v845
      %v852 = vmul.f32 %v832, %v845
      %v853 = vmul.f32 %v833, %v845
      %v854 = vmul.f32 %v834, %v845
      %v855 = vmul.f32 %v835, %v845
      %v856 = vmul.f32 %v836, %v845
      %v857 = vmul.f32 %v837, %v845
      %v858 = vmul.f32 %v838, %v845
      %v859 = vmul.f32 %v839, %v845
      %v860 = vmul.f32 %v840, %v845
      %v861 = vmul.f32 %v841, %v845
      %v862 = vadd.f32 %v810, %v846
      %v863 = vadd.f32 %v811, %v847
      %v864 = vadd.f32 %v812, %v848
      %v865 = vadd.f32 %v813, %v849
      %v866 = vadd.f32 %v814, %v850
      %v867 = vadd.f32 %v815, %v851
      %v868 = vadd.f32 %v816, %v852
      %v869 = vadd.f32 %v817, %v853
      %v870 = vadd.f32 %v818, %v854
      %v871 = vadd.f32 %v819, %v855
      %v872 = vadd.f32 %v820, %v856
      %v873 = vadd.f32 %v821, %v857
      %v874 = vadd.f32 %v822, %v858
      %v875 = vadd.f32 %v823, %v859
      %v876 = vadd.f32 %v824, %v860
      %v877 = vadd.f32 %v825, %v861
      %v878 = vld [vmem:[%s713 + $0x7] sm:$0xff]
      %v879 = vld [vmem:[%s713 + $0xf] sm:$0xff]
      %v880 = vld [vmem:[%s713 + $0x27] sm:$0xff]
      %v881 = vld [vmem:[%s713 + $0x2f] sm:$0xff]
      %v882 = vld [vmem:[%s713 + $0x47] sm:$0xff]
      %v883 = vld [vmem:[%s713 + $0x4f] sm:$0xff]
      %v884 = vld [vmem:[%s713 + $0x67] sm:$0xff]
      %v885 = vld [vmem:[%s713 + $0x6f] sm:$0xff]
      %v886 = vld [vmem:[%s713 + $0x87] sm:$0xff]
      %v887 = vld [vmem:[%s713 + $0x8f] sm:$0xff]
      %v888 = vld [vmem:[%s713 + $0xa7] sm:$0xff]
      %v889 = vld [vmem:[%s713 + $0xaf] sm:$0xff]
      %v890 = vld [vmem:[%s713 + $0xc7] sm:$0xff]
      %v891 = vld [vmem:[%s713 + $0xcf] sm:$0xff]
      %v892 = vld [vmem:[%s713 + $0xe7] sm:$0xff]
      %v893 = vld [vmem:[%s713 + $0xef] sm:$0xff]
      %v894 = vlaneseq
      %v895 = vshrl.u32 %v894, 7
      %v896 = vsub.s32 3, %v895
      %v897 = vrot.slane %v736, %v896
      %v898 = vmul.f32 %v878, %v897
      %v899 = vmul.f32 %v879, %v897
      %v900 = vmul.f32 %v880, %v897
      %v901 = vmul.f32 %v881, %v897
      %v902 = vmul.f32 %v882, %v897
      %v903 = vmul.f32 %v883, %v897
      %v904 = vmul.f32 %v884, %v897
      %v905 = vmul.f32 %v885, %v897
      %v906 = vmul.f32 %v886, %v897
      %v907 = vmul.f32 %v887, %v897
      %v908 = vmul.f32 %v888, %v897
      %v909 = vmul.f32 %v889, %v897
      %v910 = vmul.f32 %v890, %v897
      %v911 = vmul.f32 %v891, %v897
      %v912 = vmul.f32 %v892, %v897
      %v913 = vmul.f32 %v893, %v897
      %v914 = vadd.f32 %v862, %v898
      %v915 = vadd.f32 %v863, %v899
      %v916 = vadd.f32 %v864, %v900
      %v917 = vadd.f32 %v865, %v901
      %v918 = vadd.f32 %v866, %v902
      %v919 = vadd.f32 %v867, %v903
      %v920 = vadd.f32 %v868, %v904
      %v921 = vadd.f32 %v869, %v905
      %v922 = vadd.f32 %v870, %v906
      %v923 = vadd.f32 %v871, %v907
      %v924 = vadd.f32 %v872, %v908
      %v925 = vadd.f32 %v873, %v909
      %v926 = vadd.f32 %v874, %v910
      %v927 = vadd.f32 %v875, %v911
      %v928 = vadd.f32 %v876, %v912
      %v929 = vadd.f32 %v877, %v913
      %v930 = vld [vmem:[%s713 + $0x8] sm:$0xff]
      %v931 = vld [vmem:[%s713 + $0x10] sm:$0xff]
      %v932 = vld [vmem:[%s713 + $0x28] sm:$0xff]
      %v933 = vld [vmem:[%s713 + $0x30] sm:$0xff]
      %v934 = vld [vmem:[%s713 + $0x48] sm:$0xff]
      %v935 = vld [vmem:[%s713 + $0x50] sm:$0xff]
      %v936 = vld [vmem:[%s713 + $0x68] sm:$0xff]
      %v937 = vld [vmem:[%s713 + $0x70] sm:$0xff]
      %v938 = vld [vmem:[%s713 + $0x88] sm:$0xff]
      %v939 = vld [vmem:[%s713 + $0x90] sm:$0xff]
      %v940 = vld [vmem:[%s713 + $0xa8] sm:$0xff]
      %v941 = vld [vmem:[%s713 + $0xb0] sm:$0xff]
      %v942 = vld [vmem:[%s713 + $0xc8] sm:$0xff]
      %v943 = vld [vmem:[%s713 + $0xd0] sm:$0xff]
      %v944 = vld [vmem:[%s713 + $0xe8] sm:$0xff]
      %v945 = vld [vmem:[%s713 + $0xf0] sm:$0xff]
      %v946 = vlaneseq
      %v947 = vshrl.u32 %v946, 7
      %v948 = vsub.s32 4, %v947
      %v949 = vrot.slane %v736, %v948
      %v950 = vmul.f32 %v930, %v949
      %v951 = vmul.f32 %v931, %v949
      %v952 = vmul.f32 %v932, %v949
      %v953 = vmul.f32 %v933, %v949
      %v954 = vmul.f32 %v934, %v949
      %v955 = vmul.f32 %v935, %v949
      %v956 = vmul.f32 %v936, %v949
      %v957 = vmul.f32 %v937, %v949
      %v958 = vmul.f32 %v938, %v949
      %v959 = vmul.f32 %v939, %v949
      %v960 = vmul.f32 %v940, %v949
      %v961 = vmul.f32 %v941, %v949
      %v962 = vmul.f32 %v942, %v949
      %v963 = vmul.f32 %v943, %v949
      %v964 = vmul.f32 %v944, %v949
      %v965 = vmul.f32 %v945, %v949
      %v966 = vadd.f32 %v914, %v950
      %v967 = vadd.f32 %v915, %v951
      %v968 = vadd.f32 %v916, %v952
      %v969 = vadd.f32 %v917, %v953
      %v970 = vadd.f32 %v918, %v954
      %v971 = vadd.f32 %v919, %v955
      %v972 = vadd.f32 %v920, %v956
      %v973 = vadd.f32 %v921, %v957
      %v974 = vadd.f32 %v922, %v958
      %v975 = vadd.f32 %v923, %v959
      %v976 = vadd.f32 %v924, %v960
      %v977 = vadd.f32 %v925, %v961
      %v978 = vadd.f32 %v926, %v962
      %v979 = vadd.f32 %v927, %v963
      %v980 = vadd.f32 %v928, %v964
      %v981 = vadd.f32 %v929, %v965
      %v982 = vld [vmem:[%s713 + $0x9] sm:$0xff]
      %v983 = vld [vmem:[%s713 + $0x11] sm:$0xff]
      %v984 = vld [vmem:[%s713 + $0x29] sm:$0xff]
      %v985 = vld [vmem:[%s713 + $0x31] sm:$0xff]
      %v986 = vld [vmem:[%s713 + $0x49] sm:$0xff]
      %v987 = vld [vmem:[%s713 + $0x51] sm:$0xff]
      %v988 = vld [vmem:[%s713 + $0x69] sm:$0xff]
      %v989 = vld [vmem:[%s713 + $0x71] sm:$0xff]
      %v990 = vld [vmem:[%s713 + $0x89] sm:$0xff]
      %v991 = vld [vmem:[%s713 + $0x91] sm:$0xff]
      %v992 = vld [vmem:[%s713 + $0xa9] sm:$0xff]
      %v993 = vld [vmem:[%s713 + $0xb1] sm:$0xff]
      %v994 = vld [vmem:[%s713 + $0xc9] sm:$0xff]
      %v995 = vld [vmem:[%s713 + $0xd1] sm:$0xff]
      %v996 = vld [vmem:[%s713 + $0xe9] sm:$0xff]
      %v997 = vld [vmem:[%s713 + $0xf1] sm:$0xff]
      %v998 = vlaneseq
      %v999 = vshrl.u32 %v998, 7
      %v1000 = vsub.s32 5, %v999
      %v1001 = vrot.slane %v736, %v1000
      %v1002 = vmul.f32 %v982, %v1001
      %v1003 = vmul.f32 %v983, %v1001
      %v1004 = vmul.f32 %v984, %v1001
      %v1005 = vmul.f32 %v985, %v1001
      %v1006 = vmul.f32 %v986, %v1001
      %v1007 = vmul.f32 %v987, %v1001
      %v1008 = vmul.f32 %v988, %v1001
      %v1009 = vmul.f32 %v989, %v1001
      %v1010 = vmul.f32 %v990, %v1001
      %v1011 = vmul.f32 %v991, %v1001
      %v1012 = vmul.f32 %v992, %v1001
      %v1013 = vmul.f32 %v993, %v1001
      %v1014 = vmul.f32 %v994, %v1001
      %v1015 = vmul.f32 %v995, %v1001
      %v1016 = vmul.f32 %v996, %v1001
      %v1017 = vmul.f32 %v997, %v1001
      %v1018 = vadd.f32 %v966, %v1002
      %v1019 = vadd.f32 %v967, %v1003
      %v1020 = vadd.f32 %v968, %v1004
      %v1021 = vadd.f32 %v969, %v1005
      %v1022 = vadd.f32 %v970, %v1006
      %v1023 = vadd.f32 %v971, %v1007
      %v1024 = vadd.f32 %v972, %v1008
      %v1025 = vadd.f32 %v973, %v1009
      %v1026 = vadd.f32 %v974, %v1010
      %v1027 = vadd.f32 %v975, %v1011
      %v1028 = vadd.f32 %v976, %v1012
      %v1029 = vadd.f32 %v977, %v1013
      %v1030 = vadd.f32 %v978, %v1014
      %v1031 = vadd.f32 %v979, %v1015
      %v1032 = vadd.f32 %v980, %v1016
      %v1033 = vadd.f32 %v981, %v1017
      %s1034 = scalar_lea.vmem [#allocation2], 64
      %v1035 = vld [vmem:[%s1034 + $0x7] sm:$0xff]
      %v1036 = vld [vmem:[%s1034 + $0xf] sm:$0xff]
      %v1037 = vld [vmem:[%s1034 + $0x27] sm:$0xff]
      %v1038 = vld [vmem:[%s1034 + $0x2f] sm:$0xff]
      %v1039 = vld [vmem:[%s1034 + $0x47] sm:$0xff]
      %v1040 = vld [vmem:[%s1034 + $0x4f] sm:$0xff]
      %v1041 = vld [vmem:[%s1034 + $0x67] sm:$0xff]
      %v1042 = vld [vmem:[%s1034 + $0x6f] sm:$0xff]
      %v1043 = vld [vmem:[%s1034 + $0x87] sm:$0xff]
      %v1044 = vld [vmem:[%s1034 + $0x8f] sm:$0xff]
      %v1045 = vld [vmem:[%s1034 + $0xa7] sm:$0xff]
      %v1046 = vld [vmem:[%s1034 + $0xaf] sm:$0xff]
      %v1047 = vld [vmem:[%s1034 + $0xc7] sm:$0xff]
      %v1048 = vld [vmem:[%s1034 + $0xcf] sm:$0xff]
      %v1049 = vld [vmem:[%s1034 + $0xe7] sm:$0xff]
      %v1050 = vld [vmem:[%s1034 + $0xef] sm:$0xff]
      %v1051 = vlaneseq
      %v1052 = vshrl.u32 %v1051, 7
      %v1053 = vsub.s32 6, %v1052
      %v1054 = vrot.slane %v736, %v1053
      %v1055 = vmul.f32 %v1035, %v1054
      %v1056 = vmul.f32 %v1036, %v1054
      %v1057 = vmul.f32 %v1037, %v1054
      %v1058 = vmul.f32 %v1038, %v1054
      %v1059 = vmul.f32 %v1039, %v1054
      %v1060 = vmul.f32 %v1040, %v1054
      %v1061 = vmul.f32 %v1041, %v1054
      %v1062 = vmul.f32 %v1042, %v1054
      %v1063 = vmul.f32 %v1043, %v1054
      %v1064 = vmul.f32 %v1044, %v1054
      %v1065 = vmul.f32 %v1045, %v1054
      %v1066 = vmul.f32 %v1046, %v1054
      %v1067 = vmul.f32 %v1047, %v1054
      %v1068 = vmul.f32 %v1048, %v1054
      %v1069 = vmul.f32 %v1049, %v1054
      %v1070 = vmul.f32 %v1050, %v1054
      %v1071 = vadd.f32 %v1018, %v1055
      %v1072 = vadd.f32 %v1019, %v1056
      %v1073 = vadd.f32 %v1020, %v1057
      %v1074 = vadd.f32 %v1021, %v1058
      %v1075 = vadd.f32 %v1022, %v1059
      %v1076 = vadd.f32 %v1023, %v1060
      %v1077 = vadd.f32 %v1024, %v1061
      %v1078 = vadd.f32 %v1025, %v1062
      %v1079 = vadd.f32 %v1026, %v1063
      %v1080 = vadd.f32 %v1027, %v1064
      %v1081 = vadd.f32 %v1028, %v1065
      %v1082 = vadd.f32 %v1029, %v1066
      %v1083 = vadd.f32 %v1030, %v1067
      %v1084 = vadd.f32 %v1031, %v1068
      %v1085 = vadd.f32 %v1032, %v1069
      %v1086 = vadd.f32 %v1033, %v1070
      %v1087 = vld [vmem:[%s1034 + $0x8] sm:$0xff]
      %v1088 = vld [vmem:[%s1034 + $0x10] sm:$0xff]
      %v1089 = vld [vmem:[%s1034 + $0x28] sm:$0xff]
      %v1090 = vld [vmem:[%s1034 + $0x30] sm:$0xff]
      %v1091 = vld [vmem:[%s1034 + $0x48] sm:$0xff]
      %v1092 = vld [vmem:[%s1034 + $0x50] sm:$0xff]
      %v1093 = vld [vmem:[%s1034 + $0x68] sm:$0xff]
      %v1094 = vld [vmem:[%s1034 + $0x70] sm:$0xff]
      %v1095 = vld [vmem:[%s1034 + $0x88] sm:$0xff]
      %v1096 = vld [vmem:[%s1034 + $0x90] sm:$0xff]
      %v1097 = vld [vmem:[%s1034 + $0xa8] sm:$0xff]
      %v1098 = vld [vmem:[%s1034 + $0xb0] sm:$0xff]
      %v1099 = vld [vmem:[%s1034 + $0xc8] sm:$0xff]
      %v1100 = vld [vmem:[%s1034 + $0xd0] sm:$0xff]
      %v1101 = vld [vmem:[%s1034 + $0xe8] sm:$0xff]
      %v1102 = vld [vmem:[%s1034 + $0xf0] sm:$0xff]
      %v1103 = vlaneseq
      %v1104 = vshrl.u32 %v1103, 7
      %v1105 = vsub.s32 7, %v1104
      %v1106 = vrot.slane %v736, %v1105
      %v1107 = vmul.f32 %v1087, %v1106
      %v1108 = vmul.f32 %v1088, %v1106
      %v1109 = vmul.f32 %v1089, %v1106
      %v1110 = vmul.f32 %v1090, %v1106
      %v1111 = vmul.f32 %v1091, %v1106
      %v1112 = vmul.f32 %v1092, %v1106
      %v1113 = vmul.f32 %v1093, %v1106
      %v1114 = vmul.f32 %v1094, %v1106
      %v1115 = vmul.f32 %v1095, %v1106
      %v1116 = vmul.f32 %v1096, %v1106
      %v1117 = vmul.f32 %v1097, %v1106
      %v1118 = vmul.f32 %v1098, %v1106
      %v1119 = vmul.f32 %v1099, %v1106
      %v1120 = vmul.f32 %v1100, %v1106
      %v1121 = vmul.f32 %v1101, %v1106
      %v1122 = vmul.f32 %v1102, %v1106
      %v1123 = vadd.f32 %v1071, %v1107
      %v1124 = vadd.f32 %v1072, %v1108
      %v1125 = vadd.f32 %v1073, %v1109
      %v1126 = vadd.f32 %v1074, %v1110
      %v1127 = vadd.f32 %v1075, %v1111
      %v1128 = vadd.f32 %v1076, %v1112
      %v1129 = vadd.f32 %v1077, %v1113
      %v1130 = vadd.f32 %v1078, %v1114
      %v1131 = vadd.f32 %v1079, %v1115
      %v1132 = vadd.f32 %v1080, %v1116
      %v1133 = vadd.f32 %v1081, %v1117
      %v1134 = vadd.f32 %v1082, %v1118
      %v1135 = vadd.f32 %v1083, %v1119
      %v1136 = vadd.f32 %v1084, %v1120
      %v1137 = vadd.f32 %v1085, %v1121
      %v1138 = vadd.f32 %v1086, %v1122
      %v1139 = vld [vmem:[%s1034 + $0x9] sm:$0xff]
      %v1140 = vld [vmem:[%s1034 + $0x11] sm:$0xff]
      %v1141 = vld [vmem:[%s1034 + $0x29] sm:$0xff]
      %v1142 = vld [vmem:[%s1034 + $0x31] sm:$0xff]
      %v1143 = vld [vmem:[%s1034 + $0x49] sm:$0xff]
      %v1144 = vld [vmem:[%s1034 + $0x51] sm:$0xff]
      %v1145 = vld [vmem:[%s1034 + $0x69] sm:$0xff]
      %v1146 = vld [vmem:[%s1034 + $0x71] sm:$0xff]
      %v1147 = vld [vmem:[%s1034 + $0x89] sm:$0xff]
      %v1148 = vld [vmem:[%s1034 + $0x91] sm:$0xff]
      %v1149 = vld [vmem:[%s1034 + $0xa9] sm:$0xff]
      %v1150 = vld [vmem:[%s1034 + $0xb1] sm:$0xff]
      %v1151 = vld [vmem:[%s1034 + $0xc9] sm:$0xff]
      %v1152 = vld [vmem:[%s1034 + $0xd1] sm:$0xff]
      %v1153 = vld [vmem:[%s1034 + $0xe9] sm:$0xff]
      %v1154 = vld [vmem:[%s1034 + $0xf1] sm:$0xff]
      %v1155 = vlaneseq
      %v1156 = vshrl.u32 %v1155, 7
      %v1157 = vsub.s32 0, %v1156
      %v1158 = vrot.slane %v737, %v1157
      %v1159 = vmul.f32 %v1139, %v1158
      %v1160 = vmul.f32 %v1140, %v1158
      %v1161 = vmul.f32 %v1141, %v1158
      %v1162 = vmul.f32 %v1142, %v1158
      %v1163 = vmul.f32 %v1143, %v1158
      %v1164 = vmul.f32 %v1144, %v1158
      %v1165 = vmul.f32 %v1145, %v1158
      %v1166 = vmul.f32 %v1146, %v1158
      %v1167 = vmul.f32 %v1147, %v1158
      %v1168 = vmul.f32 %v1148, %v1158
      %v1169 = vmul.f32 %v1149, %v1158
      %v1170 = vmul.f32 %v1150, %v1158
      %v1171 = vmul.f32 %v1151, %v1158
      %v1172 = vmul.f32 %v1152, %v1158
      %v1173 = vmul.f32 %v1153, %v1158
      %v1174 = vmul.f32 %v1154, %v1158
      %v1175 = vadd.f32 %v1123, %v1159
      %v1176 = vadd.f32 %v1124, %v1160
      %v1177 = vadd.f32 %v1125, %v1161
      %v1178 = vadd.f32 %v1126, %v1162
      %v1179 = vadd.f32 %v1127, %v1163
      %v1180 = vadd.f32 %v1128, %v1164
      %v1181 = vadd.f32 %v1129, %v1165
      %v1182 = vadd.f32 %v1130, %v1166
      %v1183 = vadd.f32 %v1131, %v1167
      %v1184 = vadd.f32 %v1132, %v1168
      %v1185 = vadd.f32 %v1133, %v1169
      %v1186 = vadd.f32 %v1134, %v1170
      %v1187 = vadd.f32 %v1135, %v1171
      %v1188 = vadd.f32 %v1136, %v1172
      %v1189 = vadd.f32 %v1137, %v1173
      %v1190 = vadd.f32 %v1138, %v1174
      %v1191 = vld [vmem:[%s5] sm:$0x1]
      %v1193 = vlaneseq
      %v1194 = vshrl.u32 %v1193, 7
      %v1195 = vsub.s32 0, %v1194
      %v1196 = vrot.slane %v1191, %v1195
      %v1198 = vadd.f32 %v1175, %v1196
      %v1199 = vadd.f32 %v1176, %v1196
      %v1200 = vadd.f32 %v1177, %v1196
      %v1201 = vadd.f32 %v1178, %v1196
      %v1202 = vadd.f32 %v1179, %v1196
      %v1203 = vadd.f32 %v1180, %v1196
      %v1204 = vadd.f32 %v1181, %v1196
      %v1205 = vadd.f32 %v1182, %v1196
      %v1206 = vadd.f32 %v1183, %v1196
      %v1207 = vadd.f32 %v1184, %v1196
      %v1208 = vadd.f32 %v1185, %v1196
      %v1209 = vadd.f32 %v1186, %v1196
      %v1210 = vadd.f32 %v1187, %v1196
      %v1211 = vadd.f32 %v1188, %v1196
      %v1212 = vadd.f32 %v1189, %v1196
      %v1213 = vadd.f32 %v1190, %v1196
      %v1214 = vxor.u32 %v1198, 2147483648
      %v1215 = vxor.u32 %v1199, 2147483648
      %v1216 = vxor.u32 %v1200, 2147483648
      %v1217 = vxor.u32 %v1201, 2147483648
      %v1218 = vxor.u32 %v1202, 2147483648
      %v1219 = vxor.u32 %v1203, 2147483648
      %v1220 = vxor.u32 %v1204, 2147483648
      %v1221 = vxor.u32 %v1205, 2147483648
      %v1222 = vxor.u32 %v1206, 2147483648
      %v1223 = vxor.u32 %v1207, 2147483648
      %v1224 = vxor.u32 %v1208, 2147483648
      %v1225 = vxor.u32 %v1209, 2147483648
      %v1226 = vxor.u32 %v1210, 2147483648
      %v1227 = vxor.u32 %v1211, 2147483648
      %v1228 = vxor.u32 %v1212, 2147483648
      %v1229 = vxor.u32 %v1213, 2147483648
      %v1230 = vmul.f32 %v1214, 1.442695
      %v1231 = vpow.pop %v1230
      %v1232 = vmul.f32 %v1215, 1.442695
      %v1233 = vpow.pop %v1232
      %v1234 = vmul.f32 %v1216, 1.442695
      %v1235 = vpow.pop %v1234
      %v1236 = vmul.f32 %v1217, 1.442695
      %v1237 = vpow.pop %v1236
      %v1238 = vmul.f32 %v1218, 1.442695
      %v1239 = vpow.pop %v1238
      %v1240 = vmul.f32 %v1219, 1.442695
      %v1241 = vpow.pop %v1240
      %v1242 = vmul.f32 %v1220, 1.442695
      %v1243 = vpow.pop %v1242
      %v1244 = vmul.f32 %v1221, 1.442695
      %v1245 = vpow.pop %v1244
      %v1246 = vmul.f32 %v1222, 1.442695
      %v1247 = vpow.pop %v1246
      %v1248 = vmul.f32 %v1223, 1.442695
      %v1249 = vpow.pop %v1248
      %v1250 = vmul.f32 %v1224, 1.442695
      %v1251 = vpow.pop %v1250
      %v1252 = vmul.f32 %v1225, 1.442695
      %v1253 = vpow.pop %v1252
      %v1254 = vmul.f32 %v1226, 1.442695
      %v1255 = vpow.pop %v1254
      %v1256 = vmul.f32 %v1227, 1.442695
      %v1257 = vpow.pop %v1256
      %v1258 = vmul.f32 %v1228, 1.442695
      %v1259 = vpow.pop %v1258
      %v1260 = vmul.f32 %v1229, 1.442695
      %v1261 = vpow.pop %v1260
      %v1262 = vadd.f32 %v1231, 1.0
      %v1263 = vadd.f32 %v1233, 1.0
      %v1264 = vadd.f32 %v1235, 1.0
      %v1265 = vadd.f32 %v1237, 1.0
      %v1266 = vadd.f32 %v1239, 1.0
      %v1267 = vadd.f32 %v1241, 1.0
      %v1268 = vadd.f32 %v1243, 1.0
      %v1269 = vadd.f32 %v1245, 1.0
      %v1270 = vadd.f32 %v1247, 1.0
      %v1271 = vadd.f32 %v1249, 1.0
      %v1272 = vadd.f32 %v1251, 1.0
      %v1273 = vadd.f32 %v1253, 1.0
      %v1274 = vadd.f32 %v1255, 1.0
      %v1275 = vadd.f32 %v1257, 1.0
      %v1276 = vadd.f32 %v1259, 1.0
      %v1277 = vadd.f32 %v1261, 1.0
      %v1278 = vrcp.pop %v1262
      %v1279 = vmul.f32 1.0, %v1278
      %v1280 = vrcp.pop %v1263
      %v1281 = vmul.f32 1.0, %v1280
      %v1282 = vrcp.pop %v1264
      %v1283 = vmul.f32 1.0, %v1282
      %v1284 = vrcp.pop %v1265
      %v1285 = vmul.f32 1.0, %v1284
      %v1286 = vrcp.pop %v1266
      %v1287 = vmul.f32 1.0, %v1286
      %v1288 = vrcp.pop %v1267
      %v1289 = vmul.f32 1.0, %v1288
      %v1290 = vrcp.pop %v1268
      %v1291 = vmul.f32 1.0, %v1290
      %v1292 = vrcp.pop %v1269
      %v1293 = vmul.f32 1.0, %v1292
      %v1294 = vrcp.pop %v1270
      %v1295 = vmul.f32 1.0, %v1294
      %v1296 = vrcp.pop %v1271
      %v1297 = vmul.f32 1.0, %v1296
      %v1298 = vrcp.pop %v1272
      %v1299 = vmul.f32 1.0, %v1298
      %v1300 = vrcp.pop %v1273
      %v1301 = vmul.f32 1.0, %v1300
      %v1302 = vrcp.pop %v1274
      %v1303 = vmul.f32 1.0, %v1302
      %v1304 = vrcp.pop %v1275
      %v1305 = vmul.f32 1.0, %v1304
      %v1306 = vrcp.pop %v1276
      %v1307 = vmul.f32 1.0, %v1306
      %v1308 = vrcp.pop %v1277
      %v1309 = vmul.f32 1.0, %v1308
      %v1310 = vmul.f32 %v1198, %v1279
      %v1311 = vmul.f32 %v1199, %v1281
      %v1312 = vmul.f32 %v1200, %v1283
      %v1313 = vmul.f32 %v1201, %v1285
      %v1314 = vmul.f32 %v1202, %v1287
      %v1315 = vmul.f32 %v1203, %v1289
      %v1316 = vmul.f32 %v1204, %v1291
      %v1317 = vmul.f32 %v1205, %v1293
      %v1318 = vmul.f32 %v1206, %v1295
      %v1319 = vmul.f32 %v1207, %v1297
      %v1320 = vmul.f32 %v1208, %v1299
      %v1321 = vmul.f32 %v1209, %v1301
      %v1322 = vmul.f32 %v1210, %v1303
      %v1323 = vmul.f32 %v1211, %v1305
      %v1324 = vmul.f32 %v1212, %v1307
      %v1325 = vmul.f32 %v1213, %v1309
      %v1326 = vpack.c.bf16 %v1311, %v1310
      %v1327 = vpack.c.bf16 %v1313, %v1312
      %v1328 = vpack.c.bf16 %v1315, %v1314
      %v1329 = vpack.c.bf16 %v1317, %v1316
      %v1330 = vpack.c.bf16 %v1319, %v1318
      %v1331 = vpack.c.bf16 %v1321, %v1320
      %v1332 = vpack.c.bf16 %v1323, %v1322
      %v1333 = vpack.c.bf16 %v1325, %v1324
      %v1334 = vld [vmem:[%s6] sm:$0xf]
      %v1335 = vld [vmem:[%s6 + $0x4] sm:$0xf]
      %v1336 = vld [vmem:[%s6 + $0x8] sm:$0xf]
      %v1337 = vld [vmem:[%s6 + $0xc] sm:$0xf]
      %v1338 = vld [vmem:[%s6 + $0x10] sm:$0xf]
      %v1339 = vld [vmem:[%s6 + $0x14] sm:$0xf]
      %v1340 = vld [vmem:[%s6 + $0x18] sm:$0xf]
      %v1341 = vld [vmem:[%s6 + $0x1c] sm:$0xf]
      %v1342 = vld [vmem:[%s6 + $0x20] sm:$0xf]
      %v1343 = vld [vmem:[%s6 + $0x24] sm:$0xf]
      %v1344 = vld [vmem:[%s6 + $0x28] sm:$0xf]
      %v1345 = vld [vmem:[%s6 + $0x2c] sm:$0xf]
      %v1346 = vld [vmem:[%s6 + $0x30] sm:$0xf]
      %v1347 = vld [vmem:[%s6 + $0x34] sm:$0xf]
      %v1348 = vld [vmem:[%s6 + $0x38] sm:$0xf]
      %v1349 = vld [vmem:[%s6 + $0x3c] sm:$0xf]
      %v1350 = vld [vmem:[%s7] sm:$0x1]
      %v1352 = vlaneseq
      %v1353 = vshrl.u32 %v1352, 7
      %v1354 = vsub.s32 0, %v1353
      %v1355 = vrot.slane %v1350, %v1354
      %v1373 = vunpack.c.l.b16 %v1334
      %v1374 = vunpack.c.l.b16 %v1335
      %v1375 = vunpack.c.l.b16 %v1336
      %v1376 = vunpack.c.l.b16 %v1337
      %v1377 = vunpack.c.l.b16 %v1338
      %v1378 = vunpack.c.l.b16 %v1339
      %v1379 = vunpack.c.l.b16 %v1340
      %v1380 = vunpack.c.l.b16 %v1341
      %v1381 = vunpack.c.l.b16 %v1342
      %v1382 = vunpack.c.l.b16 %v1343
      %v1383 = vunpack.c.l.b16 %v1344
      %v1384 = vunpack.c.l.b16 %v1345
      %v1385 = vunpack.c.l.b16 %v1346
      %v1386 = vunpack.c.l.b16 %v1347
      %v1387 = vunpack.c.l.b16 %v1348
      %v1388 = vunpack.c.l.b16 %v1349
      %v1389 = vpack.c.b16 %v1374, %v1373
      %v1390 = vpack.c.b16 %v1376, %v1375
      %v1391 = vpack.c.b16 %v1378, %v1377
      %v1392 = vpack.c.b16 %v1380, %v1379
      %v1393 = vpack.c.b16 %v1382, %v1381
      %v1394 = vpack.c.b16 %v1384, %v1383
      %v1395 = vpack.c.b16 %v1386, %v1385
      %v1396 = vpack.c.b16 %v1388, %v1387
      %1405 = vmatprep.subr.bf16.mxu0 0
      %1406 = vmatpush1.bf16.msra.mxu0 %v1396
      %1407 = vmatprep.subr.bf16.mxu0 0
      %1408 = vmatpush1.bf16.msra.mxu0 %v1395
      %1409 = vmatprep.subr.bf16.mxu0 0
      %1410 = vmatpush1.bf16.msra.mxu0 %v1394
      %1411 = vmatprep.subr.bf16.mxu0 0
      %1412 = vmatpush1.bf16.msra.mxu0 %v1393
      %1413 = vmatprep.subr.bf16.mxu0 0
      %1414 = vmatpush1.bf16.msra.mxu0 %v1392
      %1415 = vmatprep.subr.bf16.mxu0 0
      %1416 = vmatpush1.bf16.msra.mxu0 %v1391
      %1417 = vmatprep.subr.bf16.mxu0 0
      %1418 = vmatpush1.bf16.msra.mxu0 %v1390
      %1419 = vmatprep.subr.bf16.mxu0 0
      %1420 = vmatpush1.bf16.msra.mxu0 %v1389
      %1421 = vmatprep.subr.bf16.mxu0 0
      %1422 = vmatpush2.bf16.msra.mxu0 0
      %1423 = vmatprep.subr.bf16.mxu0 0
      %1424 = vmatpush2.bf16.msra.mxu0 0
      %1425 = vmatprep.subr.bf16.mxu0 0
      %1426 = vmatpush2.bf16.msra.mxu0 0
      %1427 = vmatprep.subr.bf16.mxu0 0
      %1428 = vmatpush2.bf16.msra.mxu0 0
      %1429 = vmatprep.subr.bf16.mxu0 0
      %1430 = vmatpush2.bf16.msra.mxu0 0
      %1431 = vmatprep.subr.bf16.mxu0 0
      %1432 = vmatpush2.bf16.msra.mxu0 0
      %1433 = vmatprep.subr.bf16.mxu0 0
      %1434 = vmatpush2.bf16.msra.mxu0 0
      %1435 = vmatprep.subr.bf16.mxu0 0
      %1436 = vmatpush2.bf16.msra.mxu0 0
      %1437 = vmatprep.mubr.bf16.mxu0 0
      %1438 = vmatmul.mubr.bf16.gmra.mxu0 %v1326
      %v1439 = vpop.f32.mrf.mxu0
      %v1440 = vadd.f32 %v1355, %v1439
      %v1441 = vpop.f32.mrf.mxu0
      %v1442 = vpop.f32.mrf.mxu0
      %v1443 = vadd.f32 %v1355, %v1442
      %v1444 = vpop.f32.mrf.mxu0
      %1445 = vmatprep.mubr.bf16.mxu0 0
      %1446 = vmatmul.mubr.bf16.gmra.mxu0 %v1327
      %v1447 = vpop.f32.mrf.mxu0
      %v1448 = vadd.f32 %v1355, %v1447
      %v1449 = vpop.f32.mrf.mxu0
      %v1450 = vpop.f32.mrf.mxu0
      %v1451 = vadd.f32 %v1355, %v1450
      %v1452 = vpop.f32.mrf.mxu0
      %1453 = vmatprep.mubr.bf16.mxu0 0
      %1454 = vmatmul.mubr.bf16.gmra.mxu0 %v1328
      %v1455 = vpop.f32.mrf.mxu0
      %v1456 = vadd.f32 %v1355, %v1455
      %v1457 = vpop.f32.mrf.mxu0
      %v1458 = vpop.f32.mrf.mxu0
      %v1459 = vadd.f32 %v1355, %v1458
      %v1460 = vpop.f32.mrf.mxu0
      %1461 = vmatprep.mubr.bf16.mxu0 0
      %1462 = vmatmul.mubr.bf16.gmra.mxu0 %v1329
      %v1463 = vpop.f32.mrf.mxu0
      %v1464 = vadd.f32 %v1355, %v1463
      %v1465 = vpop.f32.mrf.mxu0
      %v1466 = vpop.f32.mrf.mxu0
      %v1467 = vadd.f32 %v1355, %v1466
      %v1468 = vpop.f32.mrf.mxu0
      %1469 = vmatprep.mubr.bf16.mxu0 0
      %1470 = vmatmul.mubr.bf16.gmra.mxu0 %v1330
      %v1471 = vpop.f32.mrf.mxu0
      %v1472 = vadd.f32 %v1355, %v1471
      %v1473 = vpop.f32.mrf.mxu0
      %v1474 = vpop.f32.mrf.mxu0
      %v1475 = vadd.f32 %v1355, %v1474
      %v1476 = vpop.f32.mrf.mxu0
      %1477 = vmatprep.mubr.bf16.mxu0 0
      %1478 = vmatmul.mubr.bf16.gmra.mxu0 %v1331
      %v1479 = vpop.f32.mrf.mxu0
      %v1480 = vadd.f32 %v1355, %v1479
      %v1481 = vpop.f32.mrf.mxu0
      %v1482 = vpop.f32.mrf.mxu0
      %v1483 = vadd.f32 %v1355, %v1482
      %v1484 = vpop.f32.mrf.mxu0
      %1485 = vmatprep.mubr.bf16.mxu0 0
      %1486 = vmatmul.mubr.bf16.gmra.mxu0 %v1332
      %v1487 = vpop.f32.mrf.mxu0
      %v1488 = vadd.f32 %v1355, %v1487
      %v1489 = vpop.f32.mrf.mxu0
      %v1490 = vpop.f32.mrf.mxu0
      %v1491 = vadd.f32 %v1355, %v1490
      %v1492 = vpop.f32.mrf.mxu0
      %1493 = vmatprep.mubr.bf16.mxu0 0
      %1494 = vmatmul.mubr.bf16.gmra.mxu0 %v1333
      %v1495 = vpop.f32.mrf.mxu0
      %v1496 = vadd.f32 %v1355, %v1495
      %v1497 = vpop.f32.mrf.mxu0
      %v1498 = vpop.f32.mrf.mxu0
      %v1499 = vadd.f32 %v1355, %v1498
      %v1500 = vpop.f32.mrf.mxu0
      %1501 = vdwg.mxu0
      %v1502 = vunpack.c.l.bf16 %v385
      %v1503 = vunpack.c.l.bf16 %v386
      %v1504 = vunpack.c.l.bf16 %v387
      %v1505 = vunpack.c.l.bf16 %v388
      %v1506 = vunpack.c.l.bf16 %v389
      %v1507 = vunpack.c.l.bf16 %v390
      %v1508 = vunpack.c.l.bf16 %v391
      %v1509 = vunpack.c.l.bf16 %v392
      %v1510 = vunpack.c.l.bf16 %v393
      %v1511 = vunpack.c.l.bf16 %v394
      %v1512 = vunpack.c.l.bf16 %v395
      %v1513 = vunpack.c.l.bf16 %v396
      %v1514 = vunpack.c.l.bf16 %v397
      %v1515 = vunpack.c.l.bf16 %v398
      %v1516 = vunpack.c.l.bf16 %v399
      %v1517 = vunpack.c.l.bf16 %v400
      %v1518 = vadd.f32 %v1440, %v1502
      %v1519 = vadd.f32 %v1443, %v1503
      %v1520 = vadd.f32 %v1448, %v1504
      %v1521 = vadd.f32 %v1451, %v1505
      %v1522 = vadd.f32 %v1456, %v1506
      %v1523 = vadd.f32 %v1459, %v1507
      %v1524 = vadd.f32 %v1464, %v1508
      %v1525 = vadd.f32 %v1467, %v1509
      %v1526 = vadd.f32 %v1472, %v1510
      %v1527 = vadd.f32 %v1475, %v1511
      %v1528 = vadd.f32 %v1480, %v1512
      %v1529 = vadd.f32 %v1483, %v1513
      %v1530 = vadd.f32 %v1488, %v1514
      %v1531 = vadd.f32 %v1491, %v1515
      %v1532 = vadd.f32 %v1496, %v1516
      %v1533 = vadd.f32 %v1499, %v1517
      %1534 = vst [vmem:[%s382] sm:$0xff] %v1518
      %1535 = vst [vmem:[%s382 + $0x8] sm:$0xff] %v1519
      %1536 = vst [vmem:[%s382 + $0x10] sm:$0xff] %v1520
      %1537 = vst [vmem:[%s382 + $0x18] sm:$0xff] %v1521
      %1538 = vst [vmem:[%s382 + $0x20] sm:$0xff] %v1522
      %1539 = vst [vmem:[%s382 + $0x28] sm:$0xff] %v1523
      %1540 = vst [vmem:[%s382 + $0x30] sm:$0xff] %v1524
      %1541 = vst [vmem:[%s382 + $0x38] sm:$0xff] %v1525
      %1542 = vst [vmem:[%s382 + $0x40] sm:$0xff] %v1526
      %1543 = vst [vmem:[%s382 + $0x48] sm:$0xff] %v1527
      %1544 = vst [vmem:[%s382 + $0x50] sm:$0xff] %v1528
      %1545 = vst [vmem:[%s382 + $0x58] sm:$0xff] %v1529
      %1546 = vst [vmem:[%s382 + $0x60] sm:$0xff] %v1530
      %1547 = vst [vmem:[%s382 + $0x68] sm:$0xff] %v1531
      %1548 = vst [vmem:[%s382 + $0x70] sm:$0xff] %v1532
      %1549 = vst [vmem:[%s382 + $0x78] sm:$0xff] %v1533
      %s1550 = smul.u32 8, %s24
      %p1551 = scmp.lt.s32.totalorder %s23, 1
      %s1552 = scalar_select %p1551, %s23, 1
      %p1553 = scmp.lt.s32.totalorder %s1550, 15
      %s1554 = scalar_select %p1553, %s1550, 15
      %s1555 = smul.addr %s1554, 2
      %s1556 = smul.addr %s1552, 32
      %s1557 = sadd.s32 %s1555, %s1556
      %s1558 = smul.addr %s1557, 8
      %s1559 = scalar_lea.vmem %s8, %s1558
      // Predicated region
      $region53: #{inverted_residual_pallas.1} parent=51 // pred_check
        %p1560 = pneg %p233
      $region54: #{inverted_residual_pallas.1} parent=51 // pred_check_branch
        %1562 = sbr.rel (%p1560) target = $region56
      $region55: #{inverted_residual_pallas.1} parent=51 // pred_region
        %s1563 = smul.u32 8, %s24
      $region56: #{inverted_residual_pallas.1} parent=51 // pred_fallthru
        _
    $region52: #{inverted_residual_pallas.1} parent=5 // pred_fallthru
      _
    %p1564 = scmp.le.s32.totalorder 2, %s14
    // Predicated region
    $region57: #{inverted_residual_pallas.1} parent=5 // pred_check
      %p1565 = pneg %p1564
    $region58: #{inverted_residual_pallas.1} parent=5 // pred_check_branch
      %1567 = sbr.rel (%p1565) target = $region60
    $region59: #{inverted_residual_pallas.1} parent=5 // pred_region
      %s1568 = ssub.s32 %s14, 2
      // Predicated region
      $region61: #{inverted_residual_pallas.1} parent=59 // pred_check
        %p1569 = pneg %p239
      $region62: #{inverted_residual_pallas.1} parent=59 // pred_check_branch
        %1571 = sbr.rel (%p1569) target = $region64
      $region63: #{inverted_residual_pallas.1} parent=59 // pred_region
        %s1572 = smul.u32 8, %s26
        %p1573 = scmp.lt.s32.totalorder %s25, 1
        %s1574 = scalar_select %p1573, %s25, 1
        %p1575 = scmp.lt.s32.totalorder %s1572, 15
        %s1576 = scalar_select %p1575, %s1572, 15
        %s1577 = smul.addr %s1576, 2
        %s1578 = smul.addr %s1574, 32
        %s1579 = sadd.s32 %s1577, %s1578
        %s1580 = smul.addr %s1579, 8
        %s1581 = scalar_lea.vmem %s8, %s1580
      $region64: #{inverted_residual_pallas.1} parent=59 // pred_fallthru
        _
    $region60: #{inverted_residual_pallas.1} parent=5 // pred_fallthru
      _
  $region6: #{inverted_residual_pallas.1} parent=0 // loop_footer
    %s18 = sadd.s32 1, %s14
  $region7: #{inverted_residual_pallas.1} parent=0 // loop_footer_branch
    %13 = sbr.rel target = $region3
  $region8: #{inverted_residual_pallas.1} parent=0 // loop_exit
    _

</llo_original>
